<compile_context>
chip_gen: v7x
topology: tpu7x:2x2x1
jax: 0.10.0
libtpu: 0.0.40
codegen_flags: <defaults>
</compile_context>

<pallas_src>
import functools

import jax
import jax.numpy as jnp
from jax.experimental import pallas as pl
from jax.experimental.pallas import tpu as pltpu


def _rnn_kernel(x_ref, wih0_ref, b0_ref, whh0_ref, w1_ref, b1_ref,
                wfc_ref, bfc_ref, out_ref, *, T, B):
    """Single-invocation 2-layer tanh RNN + FC + sigmoid.

    x_ref:    (T*B, I)  time-major, batch-flattened input
    wih0_ref: (I, H)    layer-0 input weights (transposed)
    b0_ref:   (1, H)    b_ih0 + b_hh0
    whh0_ref: (H, H)    layer-0 recurrent weights (transposed)
    w1_ref:   (2H, H)   stacked [W_ih1^T ; W_hh1^T]
    b1_ref:   (1, H)    b_ih1 + b_hh1
    wfc_ref:  (1, H)    fc weight row (output_size == 1)
    bfc_ref:  (1, 1)    fc bias
    out_ref:  (B, 1)    sigmoid probabilities
    """
    I = x_ref.shape[1]
    H = whh0_ref.shape[0]

    # Hoisted input projection: one batched matmul over all timesteps,
    # bias folded in. (T*B, I) @ (I, H) -> (T*B, H).
    xproj = (jnp.dot(x_ref[...], wih0_ref[...],
                     preferred_element_type=jnp.float32)
             + b0_ref[...])

    whh0 = whh0_ref[...]
    w1 = w1_ref[...]
    b1 = b1_ref[...]

    h0 = jnp.zeros((B, H), jnp.float32)
    h1 = jnp.zeros((B, H), jnp.float32)

    # Statically unrolled recurrence; h0/h1 stay in vregs.
    for t in range(T):
        xp_t = xproj[t * B:(t + 1) * B, :]                       # (B, H) static slice
        h0 = jnp.tanh(xp_t + jnp.dot(h0, whh0,
                                     preferred_element_type=jnp.float32))
        cat = jnp.concatenate([h0, h1], axis=-1)                 # (B, 2H)
        h1 = jnp.tanh(jnp.dot(cat, w1,
                              preferred_element_type=jnp.float32) + b1)

    # Final FC with N=1 as a lane reduction (VPU mul + XLU reduce), then sigmoid.
    logits = jnp.sum(h1 * wfc_ref[...], axis=-1, keepdims=True) + bfc_ref[...]
    out_ref[...] = jax.nn.sigmoid(logits)


@jax.jit
def rnn_forward(x_btI, params):
    """x_btI: (B, T, I) float32 (PyTorch batch_first convention)."""
    B, T, I = x_btI.shape
    O = params["bfc"].shape[1]

    # Time-major, batch-flattened for the hoisted input projection.
    x_flat = jnp.transpose(x_btI, (1, 0, 2)).reshape(T * B, I)

    vmem = pl.BlockSpec(memory_space=pltpu.MemorySpace.VMEM)
    kernel = functools.partial(_rnn_kernel, T=T, B=B)

    out = pl.pallas_call(
        kernel,
        out_shape=jax.ShapeDtypeStruct((B, O), jnp.float32),
        in_specs=[vmem] * 8,
        out_specs=vmem,
    )(
        x_flat,
        params["wih0_t"], params["b0"], params["whh0_t"],
        params["w1_t"], params["b1"],
        params["wfc_row"], params["bfc"],
    )
    return out  # (B, 1), sigmoid probabilities


def init_params(key, input_size, hidden_size, output_size):
    """Deterministic init mimicking PyTorch's U(-1/sqrt(H), 1/sqrt(H))."""
    H, I, O = hidden_size, input_size, output_size
    assert O == 1, "module spec fixes output_size = 1"
    k = 1.0 / jnp.sqrt(jnp.float32(H))
    keys = jax.random.split(key, 10)
    u = lambda kk, shape: jax.random.uniform(kk, shape, jnp.float32, -k, k)

    wih0 = u(keys[0], (H, I))
    whh0 = u(keys[1], (H, H))
    bih0 = u(keys[2], (H,))
    bhh0 = u(keys[3], (H,))
    wih1 = u(keys[4], (H, H))
    whh1 = u(keys[5], (H, H))
    bih1 = u(keys[6], (H,))
    bhh1 = u(keys[7], (H,))
    wfc = u(keys[8], (O, H))
    bfc = u(keys[9], (O,))

    return {
        "wih0_t": wih0.T,                                   # (I, H)
        "b0": (bih0 + bhh0)[None, :],                       # (1, H)
        "whh0_t": whh0.T,                                   # (H, H)
        "w1_t": jnp.concatenate([wih1.T, whh1.T], axis=0),  # (2H, H)
        "b1": (bih1 + bhh1)[None, :],                       # (1, H)
        "wfc_row": wfc,                                     # (1, H)
        "bfc": bfc[None, :],                                # (1, 1)
    }


def rnn_forward_ref(x_btI, params):
    """Pure-JAX reference (lax.scan) for correctness checking."""
    B = x_btI.shape[0]
    H = params["whh0_t"].shape[0]
    wih1_t = params["w1_t"][:H]
    whh1_t = params["w1_t"][H:]
    x_tbI = jnp.transpose(x_btI, (1, 0, 2))

    def step(carry, x_t):
        h0, h1 = carry
        h0 = jnp.tanh(x_t @ params["wih0_t"] + h0 @ params["whh0_t"]
                      + params["b0"])
        h1 = jnp.tanh(h0 @ wih1_t + h1 @ whh1_t + params["b1"])
        return (h0, h1), None

    init = (jnp.zeros((B, H), jnp.float32), jnp.zeros((B, H), jnp.float32))
    (_, h1_last), _ = jax.lax.scan(step, init, x_tbI)
    return jax.nn.sigmoid(h1_last @ params["wfc_row"].T + params["bfc"])


if __name__ == "__main__":
    # Small, deterministic example shapes consistent with the module:
    # batch=8, seq_len=8, input_size=16, hidden_size=128, output_size=1.
    B, T, I = 8, 8, 16
    H, O = 128, 1

    key = jax.random.PRNGKey(0)
    kx, kp = jax.random.split(key)
    x = jax.random.normal(kx, (B, T, I), dtype=jnp.float32)
    params = init_params(kp, I, H, O)

    out = rnn_forward(x, params)
    jax.block_until_ready(out)

    ref = rnn_forward_ref(x, params)
    assert out.shape == (B, O)
    max_err = jnp.max(jnp.abs(out - ref))
    assert jnp.allclose(out, ref, atol=1e-5, rtol=1e-5), (
        f"mismatch: max err {max_err}")

    print("KERNEL_OK")
</pallas_src>

<mosaic_0001>
module attributes {stable_mosaic.version = 11 : i64} {
  func.func @_rnn_kernel(%arg0: memref<64x16xf32, #tpu.memory_space<vmem>>, %arg1: memref<16x128xf32, #tpu.memory_space<vmem>>, %arg2: memref<1x128xf32, #tpu.memory_space<vmem>>, %arg3: memref<128x128xf32, #tpu.memory_space<vmem>>, %arg4: memref<256x128xf32, #tpu.memory_space<vmem>>, %arg5: memref<1x128xf32, #tpu.memory_space<vmem>>, %arg6: memref<1x128xf32, #tpu.memory_space<vmem>>, %arg7: memref<1x1xf32, #tpu.memory_space<vmem>>, %arg8: memref<8x1xf32, #tpu.memory_space<vmem>>) attributes {dimension_semantics = [], scalar_prefetch = 0 : i64, scratch_operands = 0 : i64, tpu.core_type = #tpu.core_type<tc>} {
    %c0 = arith.constant 0 : index
    %c0_0 = arith.constant 0 : index
    %0 = vector.load %arg0[%c0, %c0_0] : memref<64x16xf32, #tpu.memory_space<vmem>>, vector<64x16xf32>
    %c0_1 = arith.constant 0 : index
    %c0_2 = arith.constant 0 : index
    %1 = vector.load %arg1[%c0_1, %c0_2] : memref<16x128xf32, #tpu.memory_space<vmem>>, vector<16x128xf32>
    %cst = arith.constant dense<0.000000e+00> : vector<64x128xf32>
    %2 = tpu.matmul %0, %1, %cst {dimension_numbers = #tpu.dot_dimension_numbers<[1], [0], [0], [1], [0, 0, 1, 1], [], []>} : vector<64x16xf32>, vector<16x128xf32>, vector<64x128xf32> -> vector<64x128xf32>
    %c0_3 = arith.constant 0 : index
    %c0_4 = arith.constant 0 : index
    %3 = vector.load %arg2[%c0_3, %c0_4] : memref<1x128xf32, #tpu.memory_space<vmem>>, vector<1x128xf32>
    %4 = vector.broadcast %3 : vector<1x128xf32> to vector<64x128xf32>
    %5 = arith.addf %2, %4 : vector<64x128xf32>
    %c0_5 = arith.constant 0 : index
    %c0_6 = arith.constant 0 : index
    %6 = vector.load %arg3[%c0_5, %c0_6] : memref<128x128xf32, #tpu.memory_space<vmem>>, vector<128x128xf32>
    %c0_7 = arith.constant 0 : index
    %c0_8 = arith.constant 0 : index
    %7 = vector.load %arg4[%c0_7, %c0_8] : memref<256x128xf32, #tpu.memory_space<vmem>>, vector<256x128xf32>
    %c0_9 = arith.constant 0 : index
    %c0_10 = arith.constant 0 : index
    %8 = vector.load %arg5[%c0_9, %c0_10] : memref<1x128xf32, #tpu.memory_space<vmem>>, vector<1x128xf32>
    %cst_11 = arith.constant 0.000000e+00 : f32
    %9 = vector.broadcast %cst_11 : f32 to vector<8x128xf32>
    %cst_12 = arith.constant 0.000000e+00 : f32
    %10 = vector.broadcast %cst_12 : f32 to vector<8x128xf32>
    %11 = vector.extract_strided_slice %5 {offsets = [0, 0], sizes = [8, 128], strides = [1, 1]} : vector<64x128xf32> to vector<8x128xf32>
    %cst_13 = arith.constant dense<0.000000e+00> : vector<8x128xf32>
    %12 = tpu.matmul %9, %6, %cst_13 {dimension_numbers = #tpu.dot_dimension_numbers<[1], [0], [0], [1], [0, 0, 1, 1], [], []>} : vector<8x128xf32>, vector<128x128xf32>, vector<8x128xf32> -> vector<8x128xf32>
    %13 = arith.addf %11, %12 : vector<8x128xf32>
    %14 = math.tanh %13 : vector<8x128xf32>
    %15 = tpu.concatenate %14, %10 in 1 : vector<8x128xf32>, vector<8x128xf32> -> vector<8x256xf32>
    %cst_14 = arith.constant dense<0.000000e+00> : vector<8x128xf32>
    %16 = tpu.matmul %15, %7, %cst_14 {dimension_numbers = #tpu.dot_dimension_numbers<[1], [0], [0], [1], [0, 0, 1, 1], [], []>} : vector<8x256xf32>, vector<256x128xf32>, vector<8x128xf32> -> vector<8x128xf32>
    %17 = vector.broadcast %8 : vector<1x128xf32> to vector<8x128xf32>
    %18 = arith.addf %16, %17 : vector<8x128xf32>
    %19 = math.tanh %18 : vector<8x128xf32>
    %20 = vector.extract_strided_slice %5 {offsets = [8, 0], sizes = [8, 128], strides = [1, 1]} : vector<64x128xf32> to vector<8x128xf32>
    %cst_15 = arith.constant dense<0.000000e+00> : vector<8x128xf32>
    %21 = tpu.matmul %14, %6, %cst_15 {dimension_numbers = #tpu.dot_dimension_numbers<[1], [0], [0], [1], [0, 0, 1, 1], [], []>} : vector<8x128xf32>, vector<128x128xf32>, vector<8x128xf32> -> vector<8x128xf32>
    %22 = arith.addf %20, %21 : vector<8x128xf32>
    %23 = math.tanh %22 : vector<8x128xf32>
    %24 = tpu.concatenate %23, %19 in 1 : vector<8x128xf32>, vector<8x128xf32> -> vector<8x256xf32>
    %cst_16 = arith.constant dense<0.000000e+00> : vector<8x128xf32>
    %25 = tpu.matmul %24, %7, %cst_16 {dimension_numbers = #tpu.dot_dimension_numbers<[1], [0], [0], [1], [0, 0, 1, 1], [], []>} : vector<8x256xf32>, vector<256x128xf32>, vector<8x128xf32> -> vector<8x128xf32>
    %26 = vector.broadcast %8 : vector<1x128xf32> to vector<8x128xf32>
    %27 = arith.addf %25, %26 : vector<8x128xf32>
    %28 = math.tanh %27 : vector<8x128xf32>
    %29 = vector.extract_strided_slice %5 {offsets = [16, 0], sizes = [8, 128], strides = [1, 1]} : vector<64x128xf32> to vector<8x128xf32>
    %cst_17 = arith.constant dense<0.000000e+00> : vector<8x128xf32>
    %30 = tpu.matmul %23, %6, %cst_17 {dimension_numbers = #tpu.dot_dimension_numbers<[1], [0], [0], [1], [0, 0, 1, 1], [], []>} : vector<8x128xf32>, vector<128x128xf32>, vector<8x128xf32> -> vector<8x128xf32>
    %31 = arith.addf %29, %30 : vector<8x128xf32>
    %32 = math.tanh %31 : vector<8x128xf32>
    %33 = tpu.concatenate %32, %28 in 1 : vector<8x128xf32>, vector<8x128xf32> -> vector<8x256xf32>
    %cst_18 = arith.constant dense<0.000000e+00> : vector<8x128xf32>
    %34 = tpu.matmul %33, %7, %cst_18 {dimension_numbers = #tpu.dot_dimension_numbers<[1], [0], [0], [1], [0, 0, 1, 1], [], []>} : vector<8x256xf32>, vector<256x128xf32>, vector<8x128xf32> -> vector<8x128xf32>
    %35 = vector.broadcast %8 : vector<1x128xf32> to vector<8x128xf32>
    %36 = arith.addf %34, %35 : vector<8x128xf32>
    %37 = math.tanh %36 : vector<8x128xf32>
    %38 = vector.extract_strided_slice %5 {offsets = [24, 0], sizes = [8, 128], strides = [1, 1]} : vector<64x128xf32> to vector<8x128xf32>
    %cst_19 = arith.constant dense<0.000000e+00> : vector<8x128xf32>
    %39 = tpu.matmul %32, %6, %cst_19 {dimension_numbers = #tpu.dot_dimension_numbers<[1], [0], [0], [1], [0, 0, 1, 1], [], []>} : vector<8x128xf32>, vector<128x128xf32>, vector<8x128xf32> -> vector<8x128xf32>
    %40 = arith.addf %38, %39 : vector<8x128xf32>
    %41 = math.tanh %40 : vector<8x128xf32>
    %42 = tpu.concatenate %41, %37 in 1 : vector<8x128xf32>, vector<8x128xf32> -> vector<8x256xf32>
    %cst_20 = arith.constant dense<0.000000e+00> : vector<8x128xf32>
    %43 = tpu.matmul %42, %7, %cst_20 {dimension_numbers = #tpu.dot_dimension_numbers<[1], [0], [0], [1], [0, 0, 1, 1], [], []>} : vector<8x256xf32>, vector<256x128xf32>, vector<8x128xf32> -> vector<8x128xf32>
    %44 = vector.broadcast %8 : vector<1x128xf32> to vector<8x128xf32>
    %45 = arith.addf %43, %44 : vector<8x128xf32>
    %46 = math.tanh %45 : vector<8x128xf32>
    %47 = vector.extract_strided_slice %5 {offsets = [32, 0], sizes = [8, 128], strides = [1, 1]} : vector<64x128xf32> to vector<8x128xf32>
    %cst_21 = arith.constant dense<0.000000e+00> : vector<8x128xf32>
    %48 = tpu.matmul %41, %6, %cst_21 {dimension_numbers = #tpu.dot_dimension_numbers<[1], [0], [0], [1], [0, 0, 1, 1], [], []>} : vector<8x128xf32>, vector<128x128xf32>, vector<8x128xf32> -> vector<8x128xf32>
    %49 = arith.addf %47, %48 : vector<8x128xf32>
    %50 = math.tanh %49 : vector<8x128xf32>
    %51 = tpu.concatenate %50, %46 in 1 : vector<8x128xf32>, vector<8x128xf32> -> vector<8x256xf32>
    %cst_22 = arith.constant dense<0.000000e+00> : vector<8x128xf32>
    %52 = tpu.matmul %51, %7, %cst_22 {dimension_numbers = #tpu.dot_dimension_numbers<[1], [0], [0], [1], [0, 0, 1, 1], [], []>} : vector<8x256xf32>, vector<256x128xf32>, vector<8x128xf32> -> vector<8x128xf32>
    %53 = vector.broadcast %8 : vector<1x128xf32> to vector<8x128xf32>
    %54 = arith.addf %52, %53 : vector<8x128xf32>
    %55 = math.tanh %54 : vector<8x128xf32>
    %56 = vector.extract_strided_slice %5 {offsets = [40, 0], sizes = [8, 128], strides = [1, 1]} : vector<64x128xf32> to vector<8x128xf32>
    %cst_23 = arith.constant dense<0.000000e+00> : vector<8x128xf32>
    %57 = tpu.matmul %50, %6, %cst_23 {dimension_numbers = #tpu.dot_dimension_numbers<[1], [0], [0], [1], [0, 0, 1, 1], [], []>} : vector<8x128xf32>, vector<128x128xf32>, vector<8x128xf32> -> vector<8x128xf32>
    %58 = arith.addf %56, %57 : vector<8x128xf32>
    %59 = math.tanh %58 : vector<8x128xf32>
    %60 = tpu.concatenate %59, %55 in 1 : vector<8x128xf32>, vector<8x128xf32> -> vector<8x256xf32>
    %cst_24 = arith.constant dense<0.000000e+00> : vector<8x128xf32>
    %61 = tpu.matmul %60, %7, %cst_24 {dimension_numbers = #tpu.dot_dimension_numbers<[1], [0], [0], [1], [0, 0, 1, 1], [], []>} : vector<8x256xf32>, vector<256x128xf32>, vector<8x128xf32> -> vector<8x128xf32>
    %62 = vector.broadcast %8 : vector<1x128xf32> to vector<8x128xf32>
    %63 = arith.addf %61, %62 : vector<8x128xf32>
    %64 = math.tanh %63 : vector<8x128xf32>
    %65 = vector.extract_strided_slice %5 {offsets = [48, 0], sizes = [8, 128], strides = [1, 1]} : vector<64x128xf32> to vector<8x128xf32>
    %cst_25 = arith.constant dense<0.000000e+00> : vector<8x128xf32>
    %66 = tpu.matmul %59, %6, %cst_25 {dimension_numbers = #tpu.dot_dimension_numbers<[1], [0], [0], [1], [0, 0, 1, 1], [], []>} : vector<8x128xf32>, vector<128x128xf32>, vector<8x128xf32> -> vector<8x128xf32>
    %67 = arith.addf %65, %66 : vector<8x128xf32>
    %68 = math.tanh %67 : vector<8x128xf32>
    %69 = tpu.concatenate %68, %64 in 1 : vector<8x128xf32>, vector<8x128xf32> -> vector<8x256xf32>
    %cst_26 = arith.constant dense<0.000000e+00> : vector<8x128xf32>
    %70 = tpu.matmul %69, %7, %cst_26 {dimension_numbers = #tpu.dot_dimension_numbers<[1], [0], [0], [1], [0, 0, 1, 1], [], []>} : vector<8x256xf32>, vector<256x128xf32>, vector<8x128xf32> -> vector<8x128xf32>
    %71 = vector.broadcast %8 : vector<1x128xf32> to vector<8x128xf32>
    %72 = arith.addf %70, %71 : vector<8x128xf32>
    %73 = math.tanh %72 : vector<8x128xf32>
    %74 = vector.extract_strided_slice %5 {offsets = [56, 0], sizes = [8, 128], strides = [1, 1]} : vector<64x128xf32> to vector<8x128xf32>
    %cst_27 = arith.constant dense<0.000000e+00> : vector<8x128xf32>
    %75 = tpu.matmul %68, %6, %cst_27 {dimension_numbers = #tpu.dot_dimension_numbers<[1], [0], [0], [1], [0, 0, 1, 1], [], []>} : vector<8x128xf32>, vector<128x128xf32>, vector<8x128xf32> -> vector<8x128xf32>
    %76 = arith.addf %74, %75 : vector<8x128xf32>
    %77 = math.tanh %76 : vector<8x128xf32>
    %78 = tpu.concatenate %77, %73 in 1 : vector<8x128xf32>, vector<8x128xf32> -> vector<8x256xf32>
    %cst_28 = arith.constant dense<0.000000e+00> : vector<8x128xf32>
    %79 = tpu.matmul %78, %7, %cst_28 {dimension_numbers = #tpu.dot_dimension_numbers<[1], [0], [0], [1], [0, 0, 1, 1], [], []>} : vector<8x256xf32>, vector<256x128xf32>, vector<8x128xf32> -> vector<8x128xf32>
    %80 = vector.broadcast %8 : vector<1x128xf32> to vector<8x128xf32>
    %81 = arith.addf %79, %80 : vector<8x128xf32>
    %82 = math.tanh %81 : vector<8x128xf32>
    %c0_29 = arith.constant 0 : index
    %c0_30 = arith.constant 0 : index
    %83 = vector.load %arg6[%c0_29, %c0_30] : memref<1x128xf32, #tpu.memory_space<vmem>>, vector<1x128xf32>
    %84 = vector.broadcast %83 : vector<1x128xf32> to vector<8x128xf32>
    %85 = arith.mulf %82, %84 : vector<8x128xf32>
    %cst_31 = arith.constant dense<0.000000e+00> : vector<8xf32>
    %86 = vector.multi_reduction <add>, %85, %cst_31 [1] : vector<8x128xf32> to vector<8xf32>
    %87 = vector.shape_cast %86 : vector<8xf32> to vector<8x1xf32>
    %c0_32 = arith.constant 0 : index
    %c0_33 = arith.constant 0 : index
    %88 = vector.load %arg7[%c0_32, %c0_33] : memref<1x1xf32, #tpu.memory_space<vmem>>, vector<1x1xf32>
    %89 = vector.broadcast %88 : vector<1x1xf32> to vector<8x1xf32>
    %90 = arith.addf %87, %89 : vector<8x1xf32>
    %91 = arith.negf %90 : vector<8x1xf32>
    %92 = math.exp %91 : vector<8x1xf32>
    %cst_34 = arith.constant 1.000000e+00 : f32
    %93 = vector.broadcast %cst_34 : f32 to vector<8x1xf32>
    %94 = arith.addf %93, %92 : vector<8x1xf32>
    %95 = arith.divf %93, %94 : vector<8x1xf32>
    %c0_35 = arith.constant 0 : index
    %c0_36 = arith.constant 0 : index
    %96 = vector.load %arg8[%c0_35, %c0_36] : memref<8x1xf32, #tpu.memory_space<vmem>>, vector<8x1xf32>
    tpu.vector_store %arg8[%c0_35, %c0_36], %95 {strides = array<i32>} : memref<8x1xf32, #tpu.memory_space<vmem>>, vector<8x1xf32>,
    return
  }
}

</mosaic_0001>

<llo_original>
// kernel: rnn_forward.1
$region0: #{rnn_forward.1}
  #allocation0 [shape = 'u32[]', space=smem, size = 0x4, offset = 0x4, fixed_abs, tag = 'smem constant byte address 0x4 - core index']
  #allocation1 [shape = 'u32[144,128]{1,0:T(1,128)}', space=vmem, size = 0x12000, scoped, tag = 'internal scratch']
  #allocation2 [shape = 'f32[1,1]{1,0:T(1,128)S(1)}', space=vmem, size = 0x200, scoped, tag = 'scoped memory for rnn_forward.1']
  %s0 = inlined_call_operand.vmem [shape: f32[64,16], index: 0, kind: input, shape index: {}]
  %s1 = inlined_call_operand.vmem [shape: f32[16,128], index: 1, kind: input, shape index: {}]
  %s2 = inlined_call_operand.vmem [shape: f32[1,128], index: 2, kind: input, shape index: {}]
  %s3 = inlined_call_operand.vmem [shape: f32[128,128], index: 3, kind: input, shape index: {}]
  %s4 = inlined_call_operand.hbm [shape: f32[256,128], index: 4, kind: input, shape index: {}]
  %s5 = inlined_call_operand.vmem [shape: f32[1,128], index: 5, kind: input, shape index: {}]
  %s6 = inlined_call_operand.vmem [shape: f32[1,128], index: 6, kind: input, shape index: {}]
  %s7 = inlined_call_operand.<no memory space> [shape: f32[1,1], index: 7, kind: input, shape index: {}]
  %s8 = inlined_call_operand.vmem [shape: f32[8,1], index: 8, kind: output, shape index: {}]
  %s9 = sld [smem:[#allocation0]]
  $region46: #{rnn_forward.1} parent=0
    _
  %s11 = ssub.s32 1, %s9
  %s12 = scalar_select 0, %s11, %s9
  %v13 = vstv %s7
  %14 = vst [vmem:[#allocation2] sm:$0x1] %v13
  $region1: #{rnn_forward.1} parent=0
    #allocation3 [shape = 'u8[131072]{0}', space=vmem, size = 0x20000, scoped, tag = 'input window, operand 4, single buffered']
    #allocation4 [shape = 's32[1]{0}', space=sflag, size = 0x4, scoped, tag = 'scoped memory for rnn_forward.1']
    %15 = vsyncpa [#allocation4], 0
    // Predicated region
    $region2: #{rnn_forward.1} parent=1 // pred_check
      _
    $region3: #{rnn_forward.1} parent=1 // pred_check_branch
      %17 = sbr.rel (0) target = $region5
    $region4: #{rnn_forward.1} parent=1 // pred_region
      _
    $region5: #{rnn_forward.1} parent=1 // pred_fallthru
      _
    // Predicated region
    $region6: #{rnn_forward.1} parent=1 // pred_check
      _
    $region7: #{rnn_forward.1} parent=1 // pred_check_branch
      %19 = sbr.rel (0) target = $region9
    $region8: #{rnn_forward.1} parent=1 // pred_region
      _
    $region9: #{rnn_forward.1} parent=1 // pred_fallthru
      _
    // Predicated region
    $region10: #{rnn_forward.1} parent=1 // pred_check
      _
    $region11: #{rnn_forward.1} parent=1 // pred_check_branch
      %21 = sbr.rel (0) target = $region13
    $region12: #{rnn_forward.1} parent=1 // pred_region
      _
    $region13: #{rnn_forward.1} parent=1 // pred_fallthru
      _
    // Predicated region
    $region14: #{rnn_forward.1} parent=1 // pred_check
      _
    $region15: #{rnn_forward.1} parent=1 // pred_check_branch
      %23 = sbr.rel (0) target = $region17
    $region16: #{rnn_forward.1} parent=1 // pred_region
      _
    $region17: #{rnn_forward.1} parent=1 // pred_fallthru
      _
    // Predicated region
    $region18: #{rnn_forward.1} parent=1 // pred_check
      _
    $region19: #{rnn_forward.1} parent=1 // pred_check_branch
      %25 = sbr.rel (0) target = $region21
    $region20: #{rnn_forward.1} parent=1 // pred_region
      %s27 = ssub.s32 4096, 4096
      %28 = vsyncadd [#allocation4], %s27
      %s29 = sshll.u32 [#allocation3], 4
      %s30 = int_to_ptr.vmem [resolvable:$true] %s29
      %35 = dma.hbm_to_vmem [thread:$0]  %s4, 4096, %s30, [#allocation4], 128, 128, 8
    $region21: #{rnn_forward.1} parent=1 // pred_fallthru
      _
    // Predicated region
    $region22: #{rnn_forward.1} parent=1 // pred_check
      _
    $region23: #{rnn_forward.1} parent=1 // pred_check_branch
      %37 = sbr.rel (0) target = $region25
    $region24: #{rnn_forward.1} parent=1 // pred_region
      _
    $region25: #{rnn_forward.1} parent=1 // pred_fallthru
      _
    // Predicated region
    $region26: #{rnn_forward.1} parent=1 // pred_check
      _
    $region27: #{rnn_forward.1} parent=1 // pred_check_branch
      %39 = sbr.rel (0) target = $region29
    $region28: #{rnn_forward.1} parent=1 // pred_region
      _
    $region29: #{rnn_forward.1} parent=1 // pred_fallthru
      _
    // Predicated region
    $region30: #{rnn_forward.1} parent=1 // pred_check
      _
    $region31: #{rnn_forward.1} parent=1 // pred_check_branch
      %41 = sbr.rel (0) target = $region33
    $region32: #{rnn_forward.1} parent=1 // pred_region
      _
    $region33: #{rnn_forward.1} parent=1 // pred_fallthru
      _
    // Predicated region
    $region34: #{rnn_forward.1} parent=1 // pred_check
      _
    $region35: #{rnn_forward.1} parent=1 // pred_check_branch
      %43 = sbr.rel (0) target = $region37
    $region36: #{rnn_forward.1} parent=1 // pred_region
      %44 = dma.done [#allocation4], 4096
    $region37: #{rnn_forward.1} parent=1 // pred_fallthru
      _
    %v45 = vld [vmem:[%s0] sm:$0xff]
    %v46 = vld [vmem:[%s0 + $0x8] sm:$0xff]
    %v47 = vld [vmem:[%s0 + $0x10] sm:$0xff]
    %v48 = vld [vmem:[%s0 + $0x18] sm:$0xff]
    %v49 = vld [vmem:[%s0 + $0x20] sm:$0xff]
    %v50 = vld [vmem:[%s0 + $0x28] sm:$0xff]
    %v51 = vld [vmem:[%s0 + $0x30] sm:$0xff]
    %v52 = vld [vmem:[%s0 + $0x38] sm:$0xff]
    %v53 = vld [vmem:[%s1] sm:$0xff]
    %v54 = vld [vmem:[%s1 + $0x8] sm:$0xff]
    %v55 = vld [vmem:[%s2] sm:$0x1]
    %v57 = vlaneseq
    %v58 = vshrl.u32 %v57, 7
    %v59 = vsub.s32 0, %v58
    %v60 = vrot.slane %v55, %v59
    %vm62 = vcmask 130048
    %v64 = vsel %vm62, %v45, 0
    %v67 = vsel %vm62, %v46, 0
    %v70 = vsel %vm62, %v47, 0
    %v73 = vsel %vm62, %v48, 0
    %v76 = vsel %vm62, %v49, 0
    %v79 = vsel %vm62, %v50, 0
    %v82 = vsel %vm62, %v51, 0
    %v85 = vsel %vm62, %v52, 0
    %87 = vmatprep.subr.mxu0 0.0
    %88 = vmatpush1.msra.mxu0 %v53
    %89 = vmatprep.subr.mxu0 0.0
    %90 = vmatpush1.msra.mxu0 %v54
    %91 = vmatprep.subr.mxu0 0.0
    %92 = vmatpush1.msra.mxu0 0.0
    %93 = vmatprep.subr.mxu0 0.0
    %94 = vmatpush1.msra.mxu0 0.0
    %95 = vmatprep.subr.mxu0 0.0
    %96 = vmatpush1.msra.mxu0 0.0
    %97 = vmatprep.subr.mxu0 0.0
    %98 = vmatpush1.msra.mxu0 0.0
    %99 = vmatprep.subr.mxu0 0.0
    %100 = vmatpush1.msra.mxu0 0.0
    %101 = vmatprep.subr.mxu0 0.0
    %102 = vmatpush1.msra.mxu0 0.0
    %103 = vmatprep.subr.mxu0 0.0
    %104 = vmatpush1.msra.mxu0 0.0
    %105 = vmatprep.subr.mxu0 0.0
    %106 = vmatpush1.msra.mxu0 0.0
    %107 = vmatprep.subr.mxu0 0.0
    %108 = vmatpush1.msra.mxu0 0.0
    %109 = vmatprep.subr.mxu0 0.0
    %110 = vmatpush1.msra.mxu0 0.0
    %111 = vmatprep.subr.mxu0 0.0
    %112 = vmatpush1.msra.mxu0 0.0
    %113 = vmatprep.subr.mxu0 0.0
    %114 = vmatpush1.msra.mxu0 0.0
    %115 = vmatprep.subr.mxu0 0.0
    %116 = vmatpush1.msra.mxu0 0.0
    %117 = vmatprep.subr.mxu0 0.0
    %118 = vmatpush1.msra.mxu0 0.0
    %119 = vmatprep.subr.mxu0 0.0
    %120 = vmatpush1.msra.mxu0 0.0
    %121 = vmatprep.subr.mxu0 0.0
    %122 = vmatpush1.msra.mxu0 0.0
    %123 = vmatprep.subr.mxu0 0.0
    %124 = vmatpush1.msra.mxu0 0.0
    %125 = vmatprep.subr.mxu0 0.0
    %126 = vmatpush1.msra.mxu0 0.0
    %127 = vmatprep.subr.mxu0 0.0
    %128 = vmatpush1.msra.mxu0 0.0
    %129 = vmatprep.subr.mxu0 0.0
    %130 = vmatpush1.msra.mxu0 0.0
    %131 = vmatprep.subr.mxu0 0.0
    %132 = vmatpush1.msra.mxu0 0.0
    %133 = vmatprep.subr.mxu0 0.0
    %134 = vmatpush1.msra.mxu0 0.0
    %135 = vmatprep.subr.mxu0 0.0
    %136 = vmatpush1.msra.mxu0 0.0
    %137 = vmatprep.subr.mxu0 0.0
    %138 = vmatpush1.msra.mxu0 0.0
    %139 = vmatprep.subr.mxu0 0.0
    %140 = vmatpush1.msra.mxu0 0.0
    %141 = vmatprep.subr.mxu0 0.0
    %142 = vmatpush1.msra.mxu0 0.0
    %143 = vmatprep.subr.mxu0 0.0
    %144 = vmatpush1.msra.mxu0 0.0
    %145 = vmatprep.subr.mxu0 0.0
    %146 = vmatpush1.msra.mxu0 0.0
    %147 = vmatprep.subr.mxu0 0.0
    %148 = vmatpush1.msra.mxu0 0.0
    %149 = vmatprep.subr.mxu0 0.0
    %150 = vmatpush1.msra.mxu0 0.0
    %151 = vmatprep.mubr.f32.mxu0 0.0
    %152 = vmatmul.mubr.f32.gmra.mrb[0].mxu0 %v64
    %v153 = vpop.f32.mrb[0].mxu0
    %v154 = vadd.f32 %v60, %v153
    %v155 = vpop.f32.mrb[0].mxu0
    %156 = vmatprep.mubr.f32.mxu0 0.0
    %157 = vmatmul.mubr.f32.gmra.mrb[0].mxu0 %v67
    %v158 = vpop.f32.mrb[0].mxu0
    %v159 = vadd.f32 %v60, %v158
    %v160 = vpop.f32.mrb[0].mxu0
    %161 = vmatprep.mubr.f32.mxu0 0.0
    %162 = vmatmul.mubr.f32.gmra.mrb[0].mxu0 %v70
    %v163 = vpop.f32.mrb[0].mxu0
    %v164 = vadd.f32 %v60, %v163
    %v165 = vpop.f32.mrb[0].mxu0
    %166 = vmatprep.mubr.f32.mxu0 0.0
    %167 = vmatmul.mubr.f32.gmra.mrb[0].mxu0 %v73
    %v168 = vpop.f32.mrb[0].mxu0
    %v169 = vadd.f32 %v60, %v168
    %v170 = vpop.f32.mrb[0].mxu0
    %171 = vmatprep.mubr.f32.mxu0 0.0
    %172 = vmatmul.mubr.f32.gmra.mrb[0].mxu0 %v76
    %v173 = vpop.f32.mrb[0].mxu0
    %v174 = vadd.f32 %v60, %v173
    %v175 = vpop.f32.mrb[0].mxu0
    %176 = vmatprep.mubr.f32.mxu0 0.0
    %177 = vmatmul.mubr.f32.gmra.mrb[0].mxu0 %v79
    %v178 = vpop.f32.mrb[0].mxu0
    %v179 = vadd.f32 %v60, %v178
    %v180 = vpop.f32.mrb[0].mxu0
    %181 = vmatprep.mubr.f32.mxu0 0.0
    %182 = vmatmul.mubr.f32.gmra.mrb[0].mxu0 %v82
    %v183 = vpop.f32.mrb[0].mxu0
    %v184 = vadd.f32 %v60, %v183
    %v185 = vpop.f32.mrb[0].mxu0
    %186 = vmatprep.mubr.f32.mxu0 0.0
    %187 = vmatmul.mubr.f32.gmra.mrb[0].mxu0 %v85
    %v188 = vpop.f32.mrb[0].mxu0
    %v189 = vadd.f32 %v60, %v188
    %v190 = vpop.f32.mrb[0].mxu0
    %191 = vdwg.mxu0
    %v192 = vld [vmem:[%s3] sm:$0xff]
    %v193 = vld [vmem:[%s3 + $0x8] sm:$0xff]
    %v194 = vld [vmem:[%s3 + $0x10] sm:$0xff]
    %v195 = vld [vmem:[%s3 + $0x18] sm:$0xff]
    %v196 = vld [vmem:[%s3 + $0x20] sm:$0xff]
    %v197 = vld [vmem:[%s3 + $0x28] sm:$0xff]
    %v198 = vld [vmem:[%s3 + $0x30] sm:$0xff]
    %v199 = vld [vmem:[%s3 + $0x38] sm:$0xff]
    %v200 = vld [vmem:[%s3 + $0x40] sm:$0xff]
    %v201 = vld [vmem:[%s3 + $0x48] sm:$0xff]
    %v202 = vld [vmem:[%s3 + $0x50] sm:$0xff]
    %v203 = vld [vmem:[%s3 + $0x58] sm:$0xff]
    %v204 = vld [vmem:[%s3 + $0x60] sm:$0xff]
    %v205 = vld [vmem:[%s3 + $0x68] sm:$0xff]
    %v206 = vld [vmem:[%s3 + $0x70] sm:$0xff]
    %v207 = vld [vmem:[%s3 + $0x78] sm:$0xff]
    %v208 = vld [vmem:[#allocation3] sm:$0xff]
    %v209 = vld [vmem:[#allocation3 + $0x8] sm:$0xff]
    %v210 = vld [vmem:[#allocation3 + $0x10] sm:$0xff]
    %v211 = vld [vmem:[#allocation3 + $0x18] sm:$0xff]
    %v212 = vld [vmem:[#allocation3 + $0x20] sm:$0xff]
    %v213 = vld [vmem:[#allocation3 + $0x28] sm:$0xff]
    %v214 = vld [vmem:[#allocation3 + $0x30] sm:$0xff]
    %v215 = vld [vmem:[#allocation3 + $0x38] sm:$0xff]
    %v216 = vld [vmem:[#allocation3 + $0x40] sm:$0xff]
    %v217 = vld [vmem:[#allocation3 + $0x48] sm:$0xff]
    %v218 = vld [vmem:[#allocation3 + $0x50] sm:$0xff]
    %v219 = vld [vmem:[#allocation3 + $0x58] sm:$0xff]
    %v220 = vld [vmem:[#allocation3 + $0x60] sm:$0xff]
    %v221 = vld [vmem:[#allocation3 + $0x68] sm:$0xff]
    %v222 = vld [vmem:[#allocation3 + $0x70] sm:$0xff]
    %v223 = vld [vmem:[#allocation3 + $0x78] sm:$0xff]
    %v224 = vld [vmem:[#allocation3 + $0x80] sm:$0xff]
    %v225 = vld [vmem:[#allocation3 + $0x88] sm:$0xff]
    %v226 = vld [vmem:[#allocation3 + $0x90] sm:$0xff]
    %v227 = vld [vmem:[#allocation3 + $0x98] sm:$0xff]
    %v228 = vld [vmem:[#allocation3 + $0xa0] sm:$0xff]
    %v229 = vld [vmem:[#allocation3 + $0xa8] sm:$0xff]
    %v230 = vld [vmem:[#allocation3 + $0xb0] sm:$0xff]
    %v231 = vld [vmem:[#allocation3 + $0xb8] sm:$0xff]
    %v232 = vld [vmem:[#allocation3 + $0xc0] sm:$0xff]
    %v233 = vld [vmem:[#allocation3 + $0xc8] sm:$0xff]
    %v234 = vld [vmem:[#allocation3 + $0xd0] sm:$0xff]
    %v235 = vld [vmem:[#allocation3 + $0xd8] sm:$0xff]
    %v236 = vld [vmem:[#allocation3 + $0xe0] sm:$0xff]
    %v237 = vld [vmem:[#allocation3 + $0xe8] sm:$0xff]
    %v238 = vld [vmem:[#allocation3 + $0xf0] sm:$0xff]
    %v239 = vld [vmem:[#allocation3 + $0xf8] sm:$0xff]
    %v240 = vld [vmem:[%s5] sm:$0x1]
    %241 = vmatprep.subr.mxu0 0.0
    %242 = vmatpush1.msra.mxu0 %v192
    %243 = vmatprep.subr.mxu0 0.0
    %244 = vmatpush1.msra.mxu0 %v193
    %245 = vmatprep.subr.mxu0 0.0
    %246 = vmatpush1.msra.mxu0 %v194
    %247 = vmatprep.subr.mxu0 0.0
    %248 = vmatpush1.msra.mxu0 %v195
    %249 = vmatprep.subr.mxu0 0.0
    %250 = vmatpush1.msra.mxu0 %v196
    %251 = vmatprep.subr.mxu0 0.0
    %252 = vmatpush1.msra.mxu0 %v197
    %253 = vmatprep.subr.mxu0 0.0
    %254 = vmatpush1.msra.mxu0 %v198
    %255 = vmatprep.subr.mxu0 0.0
    %256 = vmatpush1.msra.mxu0 %v199
    %257 = vmatprep.subr.mxu0 0.0
    %258 = vmatpush1.msra.mxu0 %v200
    %259 = vmatprep.subr.mxu0 0.0
    %260 = vmatpush1.msra.mxu0 %v201
    %261 = vmatprep.subr.mxu0 0.0
    %262 = vmatpush1.msra.mxu0 %v202
    %263 = vmatprep.subr.mxu0 0.0
    %264 = vmatpush1.msra.mxu0 %v203
    %265 = vmatprep.subr.mxu0 0.0
    %266 = vmatpush1.msra.mxu0 %v204
    %267 = vmatprep.subr.mxu0 0.0
    %268 = vmatpush1.msra.mxu0 %v205
    %269 = vmatprep.subr.mxu0 0.0
    %270 = vmatpush1.msra.mxu0 %v206
    %271 = vmatprep.subr.mxu0 0.0
    %272 = vmatpush1.msra.mxu0 %v207
    %273 = vmatprep.subr.mxu0 0.0
    %274 = vmatpush1.msra.mxu0 0.0
    %275 = vmatprep.subr.mxu0 0.0
    %276 = vmatpush1.msra.mxu0 0.0
    %277 = vmatprep.subr.mxu0 0.0
    %278 = vmatpush1.msra.mxu0 0.0
    %279 = vmatprep.subr.mxu0 0.0
    %280 = vmatpush1.msra.mxu0 0.0
    %281 = vmatprep.subr.mxu0 0.0
    %282 = vmatpush1.msra.mxu0 0.0
    %283 = vmatprep.subr.mxu0 0.0
    %284 = vmatpush1.msra.mxu0 0.0
    %285 = vmatprep.subr.mxu0 0.0
    %286 = vmatpush1.msra.mxu0 0.0
    %287 = vmatprep.subr.mxu0 0.0
    %288 = vmatpush1.msra.mxu0 0.0
    %289 = vmatprep.subr.mxu0 0.0
    %290 = vmatpush1.msra.mxu0 0.0
    %291 = vmatprep.subr.mxu0 0.0
    %292 = vmatpush1.msra.mxu0 0.0
    %293 = vmatprep.subr.mxu0 0.0
    %294 = vmatpush1.msra.mxu0 0.0
    %295 = vmatprep.subr.mxu0 0.0
    %296 = vmatpush1.msra.mxu0 0.0
    %297 = vmatprep.subr.mxu0 0.0
    %298 = vmatpush1.msra.mxu0 0.0
    %299 = vmatprep.subr.mxu0 0.0
    %300 = vmatpush1.msra.mxu0 0.0
    %301 = vmatprep.subr.mxu0 0.0
    %302 = vmatpush1.msra.mxu0 0.0
    %303 = vmatprep.subr.mxu0 0.0
    %304 = vmatpush1.msra.mxu0 0.0
    %305 = vmatprep.mubr.f32.mxu0 0.0
    %306 = vmatmul.mubr.f32.gmra.mrb[0].mxu0 0.0
    %v307 = vpop.f32.mrb[0].mxu0
    %v308 = vadd.f32 0.0, %v307
    %v309 = vpop.f32.mrb[0].mxu0
    %310 = vdwg.mxu0
    %v311 = vadd.f32 %v154, %v308
    %v312 = vtanh.pop %v311
    %v314 = vlaneseq
    %v315 = vshrl.u32 %v314, 7
    %v316 = vsub.s32 0, %v315
    %v317 = vrot.slane %v240, %v316
    %319 = vmatprep.subr.mxu0 0.0
    %320 = vmatpush1.msra.mxu0 %v208
    %321 = vmatprep.subr.mxu0 0.0
    %322 = vmatpush1.msra.mxu0 %v209
    %323 = vmatprep.subr.mxu0 0.0
    %324 = vmatpush1.msra.mxu0 %v210
    %325 = vmatprep.subr.mxu0 0.0
    %326 = vmatpush1.msra.mxu0 %v211
    %327 = vmatprep.subr.mxu0 0.0
    %328 = vmatpush1.msra.mxu0 %v212
    %329 = vmatprep.subr.mxu0 0.0
    %330 = vmatpush1.msra.mxu0 %v213
    %331 = vmatprep.subr.mxu0 0.0
    %332 = vmatpush1.msra.mxu0 %v214
    %333 = vmatprep.subr.mxu0 0.0
    %334 = vmatpush1.msra.mxu0 %v215
    %335 = vmatprep.subr.mxu0 0.0
    %336 = vmatpush1.msra.mxu0 %v216
    %337 = vmatprep.subr.mxu0 0.0
    %338 = vmatpush1.msra.mxu0 %v217
    %339 = vmatprep.subr.mxu0 0.0
    %340 = vmatpush1.msra.mxu0 %v218
    %341 = vmatprep.subr.mxu0 0.0
    %342 = vmatpush1.msra.mxu0 %v219
    %343 = vmatprep.subr.mxu0 0.0
    %344 = vmatpush1.msra.mxu0 %v220
    %345 = vmatprep.subr.mxu0 0.0
    %346 = vmatpush1.msra.mxu0 %v221
    %347 = vmatprep.subr.mxu0 0.0
    %348 = vmatpush1.msra.mxu0 %v222
    %349 = vmatprep.subr.mxu0 0.0
    %350 = vmatpush1.msra.mxu0 %v223
    %351 = vmatprep.subr.mxu0 0.0
    %352 = vmatpush1.msra.mxu0 %v224
    %353 = vmatprep.subr.mxu0 0.0
    %354 = vmatpush1.msra.mxu0 %v225
    %355 = vmatprep.subr.mxu0 0.0
    %356 = vmatpush1.msra.mxu0 %v226
    %357 = vmatprep.subr.mxu0 0.0
    %358 = vmatpush1.msra.mxu0 %v227
    %359 = vmatprep.subr.mxu0 0.0
    %360 = vmatpush1.msra.mxu0 %v228
    %361 = vmatprep.subr.mxu0 0.0
    %362 = vmatpush1.msra.mxu0 %v229
    %363 = vmatprep.subr.mxu0 0.0
    %364 = vmatpush1.msra.mxu0 %v230
    %365 = vmatprep.subr.mxu0 0.0
    %366 = vmatpush1.msra.mxu0 %v231
    %367 = vmatprep.subr.mxu0 0.0
    %368 = vmatpush1.msra.mxu0 %v232
    %369 = vmatprep.subr.mxu0 0.0
    %370 = vmatpush1.msra.mxu0 %v233
    %371 = vmatprep.subr.mxu0 0.0
    %372 = vmatpush1.msra.mxu0 %v234
    %373 = vmatprep.subr.mxu0 0.0
    %374 = vmatpush1.msra.mxu0 %v235
    %375 = vmatprep.subr.mxu0 0.0
    %376 = vmatpush1.msra.mxu0 %v236
    %377 = vmatprep.subr.mxu0 0.0
    %378 = vmatpush1.msra.mxu0 %v237
    %379 = vmatprep.subr.mxu0 0.0
    %380 = vmatpush1.msra.mxu0 %v238
    %381 = vmatprep.subr.mxu0 0.0
    %382 = vmatpush1.msra.mxu0 %v239
    %383 = vmatprep.mubr.f32.mxu0 0.0
    %384 = vmatmul.mubr.f32.gmra.mrb[0].mxu0 %v312
    %v385 = vpop.f32.mrb[0].mxu0
    %v386 = vadd.f32 %v317, %v385
    %v387 = vpop.f32.mrb[0].mxu0
    %388 = vdwg.mxu0
    %v389 = vtanh.pop %v386
    %390 = vmatprep.subr.mxu0 0.0
    %391 = vmatpush1.msra.mxu0 %v192
    %392 = vmatprep.subr.mxu0 0.0
    %393 = vmatpush1.msra.mxu0 %v193
    %394 = vmatprep.subr.mxu0 0.0
    %395 = vmatpush1.msra.mxu0 %v194
    %396 = vmatprep.subr.mxu0 0.0
    %397 = vmatpush1.msra.mxu0 %v195
    %398 = vmatprep.subr.mxu0 0.0
    %399 = vmatpush1.msra.mxu0 %v196
    %400 = vmatprep.subr.mxu0 0.0
    %401 = vmatpush1.msra.mxu0 %v197
    %402 = vmatprep.subr.mxu0 0.0
    %403 = vmatpush1.msra.mxu0 %v198
    %404 = vmatprep.subr.mxu0 0.0
    %405 = vmatpush1.msra.mxu0 %v199
    %406 = vmatprep.subr.mxu0 0.0
    %407 = vmatpush1.msra.mxu0 %v200
    %408 = vmatprep.subr.mxu0 0.0
    %409 = vmatpush1.msra.mxu0 %v201
    %410 = vmatprep.subr.mxu0 0.0
    %411 = vmatpush1.msra.mxu0 %v202
    %412 = vmatprep.subr.mxu0 0.0
    %413 = vmatpush1.msra.mxu0 %v203
    %414 = vmatprep.subr.mxu0 0.0
    %415 = vmatpush1.msra.mxu0 %v204
    %416 = vmatprep.subr.mxu0 0.0
    %417 = vmatpush1.msra.mxu0 %v205
    %418 = vmatprep.subr.mxu0 0.0
    %419 = vmatpush1.msra.mxu0 %v206
    %420 = vmatprep.subr.mxu0 0.0
    %421 = vmatpush1.msra.mxu0 %v207
    %422 = vmatprep.subr.mxu0 0.0
    %423 = vmatpush1.msra.mxu0 0.0
    %424 = vmatprep.subr.mxu0 0.0
    %425 = vmatpush1.msra.mxu0 0.0
    %426 = vmatprep.subr.mxu0 0.0
    %427 = vmatpush1.msra.mxu0 0.0
    %428 = vmatprep.subr.mxu0 0.0
    %429 = vmatpush1.msra.mxu0 0.0
    %430 = vmatprep.subr.mxu0 0.0
    %431 = vmatpush1.msra.mxu0 0.0
    %432 = vmatprep.subr.mxu0 0.0
    %433 = vmatpush1.msra.mxu0 0.0
    %434 = vmatprep.subr.mxu0 0.0
    %435 = vmatpush1.msra.mxu0 0.0
    %436 = vmatprep.subr.mxu0 0.0
    %437 = vmatpush1.msra.mxu0 0.0
    %438 = vmatprep.subr.mxu0 0.0
    %439 = vmatpush1.msra.mxu0 0.0
    %440 = vmatprep.subr.mxu0 0.0
    %441 = vmatpush1.msra.mxu0 0.0
    %442 = vmatprep.subr.mxu0 0.0
    %443 = vmatpush1.msra.mxu0 0.0
    %444 = vmatprep.subr.mxu0 0.0
    %445 = vmatpush1.msra.mxu0 0.0
    %446 = vmatprep.subr.mxu0 0.0
    %447 = vmatpush1.msra.mxu0 0.0
    %448 = vmatprep.subr.mxu0 0.0
    %449 = vmatpush1.msra.mxu0 0.0
    %450 = vmatprep.subr.mxu0 0.0
    %451 = vmatpush1.msra.mxu0 0.0
    %452 = vmatprep.subr.mxu0 0.0
    %453 = vmatpush1.msra.mxu0 0.0
    %454 = vmatprep.mubr.f32.mxu0 0.0
    %455 = vmatmul.mubr.f32.gmra.mrb[0].mxu0 %v312
    %v456 = vpop.f32.mrb[0].mxu0
    %v457 = vadd.f32 0.0, %v456
    %v458 = vpop.f32.mrb[0].mxu0
    %459 = vdwg.mxu0
    %v460 = vadd.f32 %v159, %v457
    %v461 = vtanh.pop %v460
    %462 = vmatprep.subr.mxu0 0.0
    %463 = vmatpush1.msra.mxu0 %v208
    %464 = vmatprep.subr.mxu0 0.0
    %465 = vmatpush1.msra.mxu0 %v209
    %466 = vmatprep.subr.mxu0 0.0
    %467 = vmatpush1.msra.mxu0 %v210
    %468 = vmatprep.subr.mxu0 0.0
    %469 = vmatpush1.msra.mxu0 %v211
    %470 = vmatprep.subr.mxu0 0.0
    %471 = vmatpush1.msra.mxu0 %v212
    %472 = vmatprep.subr.mxu0 0.0
    %473 = vmatpush1.msra.mxu0 %v213
    %474 = vmatprep.subr.mxu0 0.0
    %475 = vmatpush1.msra.mxu0 %v214
    %476 = vmatprep.subr.mxu0 0.0
    %477 = vmatpush1.msra.mxu0 %v215
    %478 = vmatprep.subr.mxu0 0.0
    %479 = vmatpush1.msra.mxu0 %v216
    %480 = vmatprep.subr.mxu0 0.0
    %481 = vmatpush1.msra.mxu0 %v217
    %482 = vmatprep.subr.mxu0 0.0
    %483 = vmatpush1.msra.mxu0 %v218
    %484 = vmatprep.subr.mxu0 0.0
    %485 = vmatpush1.msra.mxu0 %v219
    %486 = vmatprep.subr.mxu0 0.0
    %487 = vmatpush1.msra.mxu0 %v220
    %488 = vmatprep.subr.mxu0 0.0
    %489 = vmatpush1.msra.mxu0 %v221
    %490 = vmatprep.subr.mxu0 0.0
    %491 = vmatpush1.msra.mxu0 %v222
    %492 = vmatprep.subr.mxu0 0.0
    %493 = vmatpush1.msra.mxu0 %v223
    %494 = vmatprep.subr.mxu0 0.0
    %495 = vmatpush1.msra.mxu0 %v224
    %496 = vmatprep.subr.mxu0 0.0
    %497 = vmatpush1.msra.mxu0 %v225
    %498 = vmatprep.subr.mxu0 0.0
    %499 = vmatpush1.msra.mxu0 %v226
    %500 = vmatprep.subr.mxu0 0.0
    %501 = vmatpush1.msra.mxu0 %v227
    %502 = vmatprep.subr.mxu0 0.0
    %503 = vmatpush1.msra.mxu0 %v228
    %504 = vmatprep.subr.mxu0 0.0
    %505 = vmatpush1.msra.mxu0 %v229
    %506 = vmatprep.subr.mxu0 0.0
    %507 = vmatpush1.msra.mxu0 %v230
    %508 = vmatprep.subr.mxu0 0.0
    %509 = vmatpush1.msra.mxu0 %v231
    %510 = vmatprep.subr.mxu0 0.0
    %511 = vmatpush1.msra.mxu0 %v232
    %512 = vmatprep.subr.mxu0 0.0
    %513 = vmatpush1.msra.mxu0 %v233
    %514 = vmatprep.subr.mxu0 0.0
    %515 = vmatpush1.msra.mxu0 %v234
    %516 = vmatprep.subr.mxu0 0.0
    %517 = vmatpush1.msra.mxu0 %v235
    %518 = vmatprep.subr.mxu0 0.0
    %519 = vmatpush1.msra.mxu0 %v236
    %520 = vmatprep.subr.mxu0 0.0
    %521 = vmatpush1.msra.mxu0 %v237
    %522 = vmatprep.subr.mxu0 0.0
    %523 = vmatpush1.msra.mxu0 %v238
    %524 = vmatprep.subr.mxu0 0.0
    %525 = vmatpush1.msra.mxu0 %v239
    %526 = vmatprep.mubr.f32.mxu0 %v389
    %527 = vmatmul.mubr.f32.gmra.mrb[0].mxu0 %v461
    %v528 = vpop.f32.mrb[0].mxu0
    %v529 = vadd.f32 %v317, %v528
    %v530 = vpop.f32.mrb[0].mxu0
    %531 = vdwg.mxu0
    %v532 = vtanh.pop %v529
    %533 = vmatprep.subr.mxu0 0.0
    %534 = vmatpush1.msra.mxu0 %v192
    %535 = vmatprep.subr.mxu0 0.0
    %536 = vmatpush1.msra.mxu0 %v193
    %537 = vmatprep.subr.mxu0 0.0
    %538 = vmatpush1.msra.mxu0 %v194
    %539 = vmatprep.subr.mxu0 0.0
    %540 = vmatpush1.msra.mxu0 %v195
    %541 = vmatprep.subr.mxu0 0.0
    %542 = vmatpush1.msra.mxu0 %v196
    %543 = vmatprep.subr.mxu0 0.0
    %544 = vmatpush1.msra.mxu0 %v197
    %545 = vmatprep.subr.mxu0 0.0
    %546 = vmatpush1.msra.mxu0 %v198
    %547 = vmatprep.subr.mxu0 0.0
    %548 = vmatpush1.msra.mxu0 %v199
    %549 = vmatprep.subr.mxu0 0.0
    %550 = vmatpush1.msra.mxu0 %v200
    %551 = vmatprep.subr.mxu0 0.0
    %552 = vmatpush1.msra.mxu0 %v201
    %553 = vmatprep.subr.mxu0 0.0
    %554 = vmatpush1.msra.mxu0 %v202
    %555 = vmatprep.subr.mxu0 0.0
    %556 = vmatpush1.msra.mxu0 %v203
    %557 = vmatprep.subr.mxu0 0.0
    %558 = vmatpush1.msra.mxu0 %v204
    %559 = vmatprep.subr.mxu0 0.0
    %560 = vmatpush1.msra.mxu0 %v205
    %561 = vmatprep.subr.mxu0 0.0
    %562 = vmatpush1.msra.mxu0 %v206
    %563 = vmatprep.subr.mxu0 0.0
    %564 = vmatpush1.msra.mxu0 %v207
    %565 = vmatprep.subr.mxu0 0.0
    %566 = vmatpush1.msra.mxu0 0.0
    %567 = vmatprep.subr.mxu0 0.0
    %568 = vmatpush1.msra.mxu0 0.0
    %569 = vmatprep.subr.mxu0 0.0
    %570 = vmatpush1.msra.mxu0 0.0
    %571 = vmatprep.subr.mxu0 0.0
    %572 = vmatpush1.msra.mxu0 0.0
    %573 = vmatprep.subr.mxu0 0.0
    %574 = vmatpush1.msra.mxu0 0.0
    %575 = vmatprep.subr.mxu0 0.0
    %576 = vmatpush1.msra.mxu0 0.0
    %577 = vmatprep.subr.mxu0 0.0
    %578 = vmatpush1.msra.mxu0 0.0
    %579 = vmatprep.subr.mxu0 0.0
    %580 = vmatpush1.msra.mxu0 0.0
    %581 = vmatprep.subr.mxu0 0.0
    %582 = vmatpush1.msra.mxu0 0.0
    %583 = vmatprep.subr.mxu0 0.0
    %584 = vmatpush1.msra.mxu0 0.0
    %585 = vmatprep.subr.mxu0 0.0
    %586 = vmatpush1.msra.mxu0 0.0
    %587 = vmatprep.subr.mxu0 0.0
    %588 = vmatpush1.msra.mxu0 0.0
    %589 = vmatprep.subr.mxu0 0.0
    %590 = vmatpush1.msra.mxu0 0.0
    %591 = vmatprep.subr.mxu0 0.0
    %592 = vmatpush1.msra.mxu0 0.0
    %593 = vmatprep.subr.mxu0 0.0
    %594 = vmatpush1.msra.mxu0 0.0
    %595 = vmatprep.subr.mxu0 0.0
    %596 = vmatpush1.msra.mxu0 0.0
    %597 = vmatprep.mubr.f32.mxu0 0.0
    %598 = vmatmul.mubr.f32.gmra.mrb[0].mxu0 %v461
    %v599 = vpop.f32.mrb[0].mxu0
    %v600 = vadd.f32 0.0, %v599
    %v601 = vpop.f32.mrb[0].mxu0
    %602 = vdwg.mxu0
    %v603 = vadd.f32 %v164, %v600
    %v604 = vtanh.pop %v603
    %605 = vmatprep.subr.mxu0 0.0
    %606 = vmatpush1.msra.mxu0 %v208
    %607 = vmatprep.subr.mxu0 0.0
    %608 = vmatpush1.msra.mxu0 %v209
    %609 = vmatprep.subr.mxu0 0.0
    %610 = vmatpush1.msra.mxu0 %v210
    %611 = vmatprep.subr.mxu0 0.0
    %612 = vmatpush1.msra.mxu0 %v211
    %613 = vmatprep.subr.mxu0 0.0
    %614 = vmatpush1.msra.mxu0 %v212
    %615 = vmatprep.subr.mxu0 0.0
    %616 = vmatpush1.msra.mxu0 %v213
    %617 = vmatprep.subr.mxu0 0.0
    %618 = vmatpush1.msra.mxu0 %v214
    %619 = vmatprep.subr.mxu0 0.0
    %620 = vmatpush1.msra.mxu0 %v215
    %621 = vmatprep.subr.mxu0 0.0
    %622 = vmatpush1.msra.mxu0 %v216
    %623 = vmatprep.subr.mxu0 0.0
    %624 = vmatpush1.msra.mxu0 %v217
    %625 = vmatprep.subr.mxu0 0.0
    %626 = vmatpush1.msra.mxu0 %v218
    %627 = vmatprep.subr.mxu0 0.0
    %628 = vmatpush1.msra.mxu0 %v219
    %629 = vmatprep.subr.mxu0 0.0
    %630 = vmatpush1.msra.mxu0 %v220
    %631 = vmatprep.subr.mxu0 0.0
    %632 = vmatpush1.msra.mxu0 %v221
    %633 = vmatprep.subr.mxu0 0.0
    %634 = vmatpush1.msra.mxu0 %v222
    %635 = vmatprep.subr.mxu0 0.0
    %636 = vmatpush1.msra.mxu0 %v223
    %637 = vmatprep.subr.mxu0 0.0
    %638 = vmatpush1.msra.mxu0 %v224
    %639 = vmatprep.subr.mxu0 0.0
    %640 = vmatpush1.msra.mxu0 %v225
    %641 = vmatprep.subr.mxu0 0.0
    %642 = vmatpush1.msra.mxu0 %v226
    %643 = vmatprep.subr.mxu0 0.0
    %644 = vmatpush1.msra.mxu0 %v227
    %645 = vmatprep.subr.mxu0 0.0
    %646 = vmatpush1.msra.mxu0 %v228
    %647 = vmatprep.subr.mxu0 0.0
    %648 = vmatpush1.msra.mxu0 %v229
    %649 = vmatprep.subr.mxu0 0.0
    %650 = vmatpush1.msra.mxu0 %v230
    %651 = vmatprep.subr.mxu0 0.0
    %652 = vmatpush1.msra.mxu0 %v231
    %653 = vmatprep.subr.mxu0 0.0
    %654 = vmatpush1.msra.mxu0 %v232
    %655 = vmatprep.subr.mxu0 0.0
    %656 = vmatpush1.msra.mxu0 %v233
    %657 = vmatprep.subr.mxu0 0.0
    %658 = vmatpush1.msra.mxu0 %v234
    %659 = vmatprep.subr.mxu0 0.0
    %660 = vmatpush1.msra.mxu0 %v235
    %661 = vmatprep.subr.mxu0 0.0
    %662 = vmatpush1.msra.mxu0 %v236
    %663 = vmatprep.subr.mxu0 0.0
    %664 = vmatpush1.msra.mxu0 %v237
    %665 = vmatprep.subr.mxu0 0.0
    %666 = vmatpush1.msra.mxu0 %v238
    %667 = vmatprep.subr.mxu0 0.0
    %668 = vmatpush1.msra.mxu0 %v239
    %669 = vmatprep.mubr.f32.mxu0 %v532
    %670 = vmatmul.mubr.f32.gmra.mrb[0].mxu0 %v604
    %v671 = vpop.f32.mrb[0].mxu0
    %v672 = vadd.f32 %v317, %v671
    %v673 = vpop.f32.mrb[0].mxu0
    %674 = vdwg.mxu0
    %v675 = vtanh.pop %v672
    %676 = vmatprep.subr.mxu0 0.0
    %677 = vmatpush1.msra.mxu0 %v192
    %678 = vmatprep.subr.mxu0 0.0
    %679 = vmatpush1.msra.mxu0 %v193
    %680 = vmatprep.subr.mxu0 0.0
    %681 = vmatpush1.msra.mxu0 %v194
    %682 = vmatprep.subr.mxu0 0.0
    %683 = vmatpush1.msra.mxu0 %v195
    %684 = vmatprep.subr.mxu0 0.0
    %685 = vmatpush1.msra.mxu0 %v196
    %686 = vmatprep.subr.mxu0 0.0
    %687 = vmatpush1.msra.mxu0 %v197
    %688 = vmatprep.subr.mxu0 0.0
    %689 = vmatpush1.msra.mxu0 %v198
    %690 = vmatprep.subr.mxu0 0.0
    %691 = vmatpush1.msra.mxu0 %v199
    %692 = vmatprep.subr.mxu0 0.0
    %693 = vmatpush1.msra.mxu0 %v200
    %694 = vmatprep.subr.mxu0 0.0
    %695 = vmatpush1.msra.mxu0 %v201
    %696 = vmatprep.subr.mxu0 0.0
    %697 = vmatpush1.msra.mxu0 %v202
    %698 = vmatprep.subr.mxu0 0.0
    %699 = vmatpush1.msra.mxu0 %v203
    %700 = vmatprep.subr.mxu0 0.0
    %701 = vmatpush1.msra.mxu0 %v204
    %702 = vmatprep.subr.mxu0 0.0
    %703 = vmatpush1.msra.mxu0 %v205
    %704 = vmatprep.subr.mxu0 0.0
    %705 = vmatpush1.msra.mxu0 %v206
    %706 = vmatprep.subr.mxu0 0.0
    %707 = vmatpush1.msra.mxu0 %v207
    %708 = vmatprep.subr.mxu0 0.0
    %709 = vmatpush1.msra.mxu0 0.0
    %710 = vmatprep.subr.mxu0 0.0
    %711 = vmatpush1.msra.mxu0 0.0
    %712 = vmatprep.subr.mxu0 0.0
    %713 = vmatpush1.msra.mxu0 0.0
    %714 = vmatprep.subr.mxu0 0.0
    %715 = vmatpush1.msra.mxu0 0.0
    %716 = vmatprep.subr.mxu0 0.0
    %717 = vmatpush1.msra.mxu0 0.0
    %718 = vmatprep.subr.mxu0 0.0
    %719 = vmatpush1.msra.mxu0 0.0
    %720 = vmatprep.subr.mxu0 0.0
    %721 = vmatpush1.msra.mxu0 0.0
    %722 = vmatprep.subr.mxu0 0.0
    %723 = vmatpush1.msra.mxu0 0.0
    %724 = vmatprep.subr.mxu0 0.0
    %725 = vmatpush1.msra.mxu0 0.0
    %726 = vmatprep.subr.mxu0 0.0
    %727 = vmatpush1.msra.mxu0 0.0
    %728 = vmatprep.subr.mxu0 0.0
    %729 = vmatpush1.msra.mxu0 0.0
    %730 = vmatprep.subr.mxu0 0.0
    %731 = vmatpush1.msra.mxu0 0.0
    %732 = vmatprep.subr.mxu0 0.0
    %733 = vmatpush1.msra.mxu0 0.0
    %734 = vmatprep.subr.mxu0 0.0
    %735 = vmatpush1.msra.mxu0 0.0
    %736 = vmatprep.subr.mxu0 0.0
    %737 = vmatpush1.msra.mxu0 0.0
    %738 = vmatprep.subr.mxu0 0.0
    %739 = vmatpush1.msra.mxu0 0.0
    %740 = vmatprep.mubr.f32.mxu0 0.0
    %741 = vmatmul.mubr.f32.gmra.mrb[0].mxu0 %v604
    %v742 = vpop.f32.mrb[0].mxu0
    %v743 = vadd.f32 0.0, %v742
    %v744 = vpop.f32.mrb[0].mxu0
    %745 = vdwg.mxu0
    %v746 = vadd.f32 %v169, %v743
    %v747 = vtanh.pop %v746
    %748 = vmatprep.subr.mxu0 0.0
    %749 = vmatpush1.msra.mxu0 %v208
    %750 = vmatprep.subr.mxu0 0.0
    %751 = vmatpush1.msra.mxu0 %v209
    %752 = vmatprep.subr.mxu0 0.0
    %753 = vmatpush1.msra.mxu0 %v210
    %754 = vmatprep.subr.mxu0 0.0
    %755 = vmatpush1.msra.mxu0 %v211
    %756 = vmatprep.subr.mxu0 0.0
    %757 = vmatpush1.msra.mxu0 %v212
    %758 = vmatprep.subr.mxu0 0.0
    %759 = vmatpush1.msra.mxu0 %v213
    %760 = vmatprep.subr.mxu0 0.0
    %761 = vmatpush1.msra.mxu0 %v214
    %762 = vmatprep.subr.mxu0 0.0
    %763 = vmatpush1.msra.mxu0 %v215
    %764 = vmatprep.subr.mxu0 0.0
    %765 = vmatpush1.msra.mxu0 %v216
    %766 = vmatprep.subr.mxu0 0.0
    %767 = vmatpush1.msra.mxu0 %v217
    %768 = vmatprep.subr.mxu0 0.0
    %769 = vmatpush1.msra.mxu0 %v218
    %770 = vmatprep.subr.mxu0 0.0
    %771 = vmatpush1.msra.mxu0 %v219
    %772 = vmatprep.subr.mxu0 0.0
    %773 = vmatpush1.msra.mxu0 %v220
    %774 = vmatprep.subr.mxu0 0.0
    %775 = vmatpush1.msra.mxu0 %v221
    %776 = vmatprep.subr.mxu0 0.0
    %777 = vmatpush1.msra.mxu0 %v222
    %778 = vmatprep.subr.mxu0 0.0
    %779 = vmatpush1.msra.mxu0 %v223
    %780 = vmatprep.subr.mxu0 0.0
    %781 = vmatpush1.msra.mxu0 %v224
    %782 = vmatprep.subr.mxu0 0.0
    %783 = vmatpush1.msra.mxu0 %v225
    %784 = vmatprep.subr.mxu0 0.0
    %785 = vmatpush1.msra.mxu0 %v226
    %786 = vmatprep.subr.mxu0 0.0
    %787 = vmatpush1.msra.mxu0 %v227
    %788 = vmatprep.subr.mxu0 0.0
    %789 = vmatpush1.msra.mxu0 %v228
    %790 = vmatprep.subr.mxu0 0.0
    %791 = vmatpush1.msra.mxu0 %v229
    %792 = vmatprep.subr.mxu0 0.0
    %793 = vmatpush1.msra.mxu0 %v230
    %794 = vmatprep.subr.mxu0 0.0
    %795 = vmatpush1.msra.mxu0 %v231
    %796 = vmatprep.subr.mxu0 0.0
    %797 = vmatpush1.msra.mxu0 %v232
    %798 = vmatprep.subr.mxu0 0.0
    %799 = vmatpush1.msra.mxu0 %v233
    %800 = vmatprep.subr.mxu0 0.0
    %801 = vmatpush1.msra.mxu0 %v234
    %802 = vmatprep.subr.mxu0 0.0
    %803 = vmatpush1.msra.mxu0 %v235
    %804 = vmatprep.subr.mxu0 0.0
    %805 = vmatpush1.msra.mxu0 %v236
    %806 = vmatprep.subr.mxu0 0.0
    %807 = vmatpush1.msra.mxu0 %v237
    %808 = vmatprep.subr.mxu0 0.0
    %809 = vmatpush1.msra.mxu0 %v238
    %810 = vmatprep.subr.mxu0 0.0
    %811 = vmatpush1.msra.mxu0 %v239
    %812 = vmatprep.mubr.f32.mxu0 %v675
    %813 = vmatmul.mubr.f32.gmra.mrb[0].mxu0 %v747
    %v814 = vpop.f32.mrb[0].mxu0
    %v815 = vadd.f32 %v317, %v814
    %v816 = vpop.f32.mrb[0].mxu0
    %817 = vdwg.mxu0
    %v818 = vtanh.pop %v815
    %819 = vmatprep.subr.mxu0 0.0
    %820 = vmatpush1.msra.mxu0 %v192
    %821 = vmatprep.subr.mxu0 0.0
    %822 = vmatpush1.msra.mxu0 %v193
    %823 = vmatprep.subr.mxu0 0.0
    %824 = vmatpush1.msra.mxu0 %v194
    %825 = vmatprep.subr.mxu0 0.0
    %826 = vmatpush1.msra.mxu0 %v195
    %827 = vmatprep.subr.mxu0 0.0
    %828 = vmatpush1.msra.mxu0 %v196
    %829 = vmatprep.subr.mxu0 0.0
    %830 = vmatpush1.msra.mxu0 %v197
    %831 = vmatprep.subr.mxu0 0.0
    %832 = vmatpush1.msra.mxu0 %v198
    %833 = vmatprep.subr.mxu0 0.0
    %834 = vmatpush1.msra.mxu0 %v199
    %835 = vmatprep.subr.mxu0 0.0
    %836 = vmatpush1.msra.mxu0 %v200
    %837 = vmatprep.subr.mxu0 0.0
    %838 = vmatpush1.msra.mxu0 %v201
    %839 = vmatprep.subr.mxu0 0.0
    %840 = vmatpush1.msra.mxu0 %v202
    %841 = vmatprep.subr.mxu0 0.0
    %842 = vmatpush1.msra.mxu0 %v203
    %843 = vmatprep.subr.mxu0 0.0
    %844 = vmatpush1.msra.mxu0 %v204
    %845 = vmatprep.subr.mxu0 0.0
    %846 = vmatpush1.msra.mxu0 %v205
    %847 = vmatprep.subr.mxu0 0.0
    %848 = vmatpush1.msra.mxu0 %v206
    %849 = vmatprep.subr.mxu0 0.0
    %850 = vmatpush1.msra.mxu0 %v207
    %851 = vmatprep.subr.mxu0 0.0
    %852 = vmatpush1.msra.mxu0 0.0
    %853 = vmatprep.subr.mxu0 0.0
    %854 = vmatpush1.msra.mxu0 0.0
    %855 = vmatprep.subr.mxu0 0.0
    %856 = vmatpush1.msra.mxu0 0.0
    %857 = vmatprep.subr.mxu0 0.0
    %858 = vmatpush1.msra.mxu0 0.0
    %859 = vmatprep.subr.mxu0 0.0
    %860 = vmatpush1.msra.mxu0 0.0
    %861 = vmatprep.subr.mxu0 0.0
    %862 = vmatpush1.msra.mxu0 0.0
    %863 = vmatprep.subr.mxu0 0.0
    %864 = vmatpush1.msra.mxu0 0.0
    %865 = vmatprep.subr.mxu0 0.0
    %866 = vmatpush1.msra.mxu0 0.0
    %867 = vmatprep.subr.mxu0 0.0
    %868 = vmatpush1.msra.mxu0 0.0
    %869 = vmatprep.subr.mxu0 0.0
    %870 = vmatpush1.msra.mxu0 0.0
    %871 = vmatprep.subr.mxu0 0.0
    %872 = vmatpush1.msra.mxu0 0.0
    %873 = vmatprep.subr.mxu0 0.0
    %874 = vmatpush1.msra.mxu0 0.0
    %875 = vmatprep.subr.mxu0 0.0
    %876 = vmatpush1.msra.mxu0 0.0
    %877 = vmatprep.subr.mxu0 0.0
    %878 = vmatpush1.msra.mxu0 0.0
    %879 = vmatprep.subr.mxu0 0.0
    %880 = vmatpush1.msra.mxu0 0.0
    %881 = vmatprep.subr.mxu0 0.0
    %882 = vmatpush1.msra.mxu0 0.0
    %883 = vmatprep.mubr.f32.mxu0 0.0
    %884 = vmatmul.mubr.f32.gmra.mrb[0].mxu0 %v747
    %v885 = vpop.f32.mrb[0].mxu0
    %v886 = vadd.f32 0.0, %v885
    %v887 = vpop.f32.mrb[0].mxu0
    %888 = vdwg.mxu0
    %v889 = vadd.f32 %v174, %v886
    %v890 = vtanh.pop %v889
    %891 = vmatprep.subr.mxu0 0.0
    %892 = vmatpush1.msra.mxu0 %v208
    %893 = vmatprep.subr.mxu0 0.0
    %894 = vmatpush1.msra.mxu0 %v209
    %895 = vmatprep.subr.mxu0 0.0
    %896 = vmatpush1.msra.mxu0 %v210
    %897 = vmatprep.subr.mxu0 0.0
    %898 = vmatpush1.msra.mxu0 %v211
    %899 = vmatprep.subr.mxu0 0.0
    %900 = vmatpush1.msra.mxu0 %v212
    %901 = vmatprep.subr.mxu0 0.0
    %902 = vmatpush1.msra.mxu0 %v213
    %903 = vmatprep.subr.mxu0 0.0
    %904 = vmatpush1.msra.mxu0 %v214
    %905 = vmatprep.subr.mxu0 0.0
    %906 = vmatpush1.msra.mxu0 %v215
    %907 = vmatprep.subr.mxu0 0.0
    %908 = vmatpush1.msra.mxu0 %v216
    %909 = vmatprep.subr.mxu0 0.0
    %910 = vmatpush1.msra.mxu0 %v217
    %911 = vmatprep.subr.mxu0 0.0
    %912 = vmatpush1.msra.mxu0 %v218
    %913 = vmatprep.subr.mxu0 0.0
    %914 = vmatpush1.msra.mxu0 %v219
    %915 = vmatprep.subr.mxu0 0.0
    %916 = vmatpush1.msra.mxu0 %v220
    %917 = vmatprep.subr.mxu0 0.0
    %918 = vmatpush1.msra.mxu0 %v221
    %919 = vmatprep.subr.mxu0 0.0
    %920 = vmatpush1.msra.mxu0 %v222
    %921 = vmatprep.subr.mxu0 0.0
    %922 = vmatpush1.msra.mxu0 %v223
    %923 = vmatprep.subr.mxu0 0.0
    %924 = vmatpush1.msra.mxu0 %v224
    %925 = vmatprep.subr.mxu0 0.0
    %926 = vmatpush1.msra.mxu0 %v225
    %927 = vmatprep.subr.mxu0 0.0
    %928 = vmatpush1.msra.mxu0 %v226
    %929 = vmatprep.subr.mxu0 0.0
    %930 = vmatpush1.msra.mxu0 %v227
    %931 = vmatprep.subr.mxu0 0.0
    %932 = vmatpush1.msra.mxu0 %v228
    %933 = vmatprep.subr.mxu0 0.0
    %934 = vmatpush1.msra.mxu0 %v229
    %935 = vmatprep.subr.mxu0 0.0
    %936 = vmatpush1.msra.mxu0 %v230
    %937 = vmatprep.subr.mxu0 0.0
    %938 = vmatpush1.msra.mxu0 %v231
    %939 = vmatprep.subr.mxu0 0.0
    %940 = vmatpush1.msra.mxu0 %v232
    %941 = vmatprep.subr.mxu0 0.0
    %942 = vmatpush1.msra.mxu0 %v233
    %943 = vmatprep.subr.mxu0 0.0
    %944 = vmatpush1.msra.mxu0 %v234
    %945 = vmatprep.subr.mxu0 0.0
    %946 = vmatpush1.msra.mxu0 %v235
    %947 = vmatprep.subr.mxu0 0.0
    %948 = vmatpush1.msra.mxu0 %v236
    %949 = vmatprep.subr.mxu0 0.0
    %950 = vmatpush1.msra.mxu0 %v237
    %951 = vmatprep.subr.mxu0 0.0
    %952 = vmatpush1.msra.mxu0 %v238
    %953 = vmatprep.subr.mxu0 0.0
    %954 = vmatpush1.msra.mxu0 %v239
    %955 = vmatprep.mubr.f32.mxu0 %v818
    %956 = vmatmul.mubr.f32.gmra.mrb[0].mxu0 %v890
    %v957 = vpop.f32.mrb[0].mxu0
    %v958 = vadd.f32 %v317, %v957
    %v959 = vpop.f32.mrb[0].mxu0
    %960 = vdwg.mxu0
    %v961 = vtanh.pop %v958
    %962 = vmatprep.subr.mxu0 0.0
    %963 = vmatpush1.msra.mxu0 %v192
    %964 = vmatprep.subr.mxu0 0.0
    %965 = vmatpush1.msra.mxu0 %v193
    %966 = vmatprep.subr.mxu0 0.0
    %967 = vmatpush1.msra.mxu0 %v194
    %968 = vmatprep.subr.mxu0 0.0
    %969 = vmatpush1.msra.mxu0 %v195
    %970 = vmatprep.subr.mxu0 0.0
    %971 = vmatpush1.msra.mxu0 %v196
    %972 = vmatprep.subr.mxu0 0.0
    %973 = vmatpush1.msra.mxu0 %v197
    %974 = vmatprep.subr.mxu0 0.0
    %975 = vmatpush1.msra.mxu0 %v198
    %976 = vmatprep.subr.mxu0 0.0
    %977 = vmatpush1.msra.mxu0 %v199
    %978 = vmatprep.subr.mxu0 0.0
    %979 = vmatpush1.msra.mxu0 %v200
    %980 = vmatprep.subr.mxu0 0.0
    %981 = vmatpush1.msra.mxu0 %v201
    %982 = vmatprep.subr.mxu0 0.0
    %983 = vmatpush1.msra.mxu0 %v202
    %984 = vmatprep.subr.mxu0 0.0
    %985 = vmatpush1.msra.mxu0 %v203
    %986 = vmatprep.subr.mxu0 0.0
    %987 = vmatpush1.msra.mxu0 %v204
    %988 = vmatprep.subr.mxu0 0.0
    %989 = vmatpush1.msra.mxu0 %v205
    %990 = vmatprep.subr.mxu0 0.0
    %991 = vmatpush1.msra.mxu0 %v206
    %992 = vmatprep.subr.mxu0 0.0
    %993 = vmatpush1.msra.mxu0 %v207
    %994 = vmatprep.subr.mxu0 0.0
    %995 = vmatpush1.msra.mxu0 0.0
    %996 = vmatprep.subr.mxu0 0.0
    %997 = vmatpush1.msra.mxu0 0.0
    %998 = vmatprep.subr.mxu0 0.0
    %999 = vmatpush1.msra.mxu0 0.0
    %1000 = vmatprep.subr.mxu0 0.0
    %1001 = vmatpush1.msra.mxu0 0.0
    %1002 = vmatprep.subr.mxu0 0.0
    %1003 = vmatpush1.msra.mxu0 0.0
    %1004 = vmatprep.subr.mxu0 0.0
    %1005 = vmatpush1.msra.mxu0 0.0
    %1006 = vmatprep.subr.mxu0 0.0
    %1007 = vmatpush1.msra.mxu0 0.0
    %1008 = vmatprep.subr.mxu0 0.0
    %1009 = vmatpush1.msra.mxu0 0.0
    %1010 = vmatprep.subr.mxu0 0.0
    %1011 = vmatpush1.msra.mxu0 0.0
    %1012 = vmatprep.subr.mxu0 0.0
    %1013 = vmatpush1.msra.mxu0 0.0
    %1014 = vmatprep.subr.mxu0 0.0
    %1015 = vmatpush1.msra.mxu0 0.0
    %1016 = vmatprep.subr.mxu0 0.0
    %1017 = vmatpush1.msra.mxu0 0.0
    %1018 = vmatprep.subr.mxu0 0.0
    %1019 = vmatpush1.msra.mxu0 0.0
    %1020 = vmatprep.subr.mxu0 0.0
    %1021 = vmatpush1.msra.mxu0 0.0
    %1022 = vmatprep.subr.mxu0 0.0
    %1023 = vmatpush1.msra.mxu0 0.0
    %1024 = vmatprep.subr.mxu0 0.0
    %1025 = vmatpush1.msra.mxu0 0.0
    %1026 = vmatprep.mubr.f32.mxu0 0.0
    %1027 = vmatmul.mubr.f32.gmra.mrb[0].mxu0 %v890
    %v1028 = vpop.f32.mrb[0].mxu0
    %v1029 = vadd.f32 0.0, %v1028
    %v1030 = vpop.f32.mrb[0].mxu0
    %1031 = vdwg.mxu0
    %v1032 = vadd.f32 %v179, %v1029
    %v1033 = vtanh.pop %v1032
    %1034 = vmatprep.subr.mxu0 0.0
    %1035 = vmatpush1.msra.mxu0 %v208
    %1036 = vmatprep.subr.mxu0 0.0
    %1037 = vmatpush1.msra.mxu0 %v209
    %1038 = vmatprep.subr.mxu0 0.0
    %1039 = vmatpush1.msra.mxu0 %v210
    %1040 = vmatprep.subr.mxu0 0.0
    %1041 = vmatpush1.msra.mxu0 %v211
    %1042 = vmatprep.subr.mxu0 0.0
    %1043 = vmatpush1.msra.mxu0 %v212
    %1044 = vmatprep.subr.mxu0 0.0
    %1045 = vmatpush1.msra.mxu0 %v213
    %1046 = vmatprep.subr.mxu0 0.0
    %1047 = vmatpush1.msra.mxu0 %v214
    %1048 = vmatprep.subr.mxu0 0.0
    %1049 = vmatpush1.msra.mxu0 %v215
    %1050 = vmatprep.subr.mxu0 0.0
    %1051 = vmatpush1.msra.mxu0 %v216
    %1052 = vmatprep.subr.mxu0 0.0
    %1053 = vmatpush1.msra.mxu0 %v217
    %1054 = vmatprep.subr.mxu0 0.0
    %1055 = vmatpush1.msra.mxu0 %v218
    %1056 = vmatprep.subr.mxu0 0.0
    %1057 = vmatpush1.msra.mxu0 %v219
    %1058 = vmatprep.subr.mxu0 0.0
    %1059 = vmatpush1.msra.mxu0 %v220
    %1060 = vmatprep.subr.mxu0 0.0
    %1061 = vmatpush1.msra.mxu0 %v221
    %1062 = vmatprep.subr.mxu0 0.0
    %1063 = vmatpush1.msra.mxu0 %v222
    %1064 = vmatprep.subr.mxu0 0.0
    %1065 = vmatpush1.msra.mxu0 %v223
    %1066 = vmatprep.subr.mxu0 0.0
    %1067 = vmatpush1.msra.mxu0 %v224
    %1068 = vmatprep.subr.mxu0 0.0
    %1069 = vmatpush1.msra.mxu0 %v225
    %1070 = vmatprep.subr.mxu0 0.0
    %1071 = vmatpush1.msra.mxu0 %v226
    %1072 = vmatprep.subr.mxu0 0.0
    %1073 = vmatpush1.msra.mxu0 %v227
    %1074 = vmatprep.subr.mxu0 0.0
    %1075 = vmatpush1.msra.mxu0 %v228
    %1076 = vmatprep.subr.mxu0 0.0
    %1077 = vmatpush1.msra.mxu0 %v229
    %1078 = vmatprep.subr.mxu0 0.0
    %1079 = vmatpush1.msra.mxu0 %v230
    %1080 = vmatprep.subr.mxu0 0.0
    %1081 = vmatpush1.msra.mxu0 %v231
    %1082 = vmatprep.subr.mxu0 0.0
    %1083 = vmatpush1.msra.mxu0 %v232
    %1084 = vmatprep.subr.mxu0 0.0
    %1085 = vmatpush1.msra.mxu0 %v233
    %1086 = vmatprep.subr.mxu0 0.0
    %1087 = vmatpush1.msra.mxu0 %v234
    %1088 = vmatprep.subr.mxu0 0.0
    %1089 = vmatpush1.msra.mxu0 %v235
    %1090 = vmatprep.subr.mxu0 0.0
    %1091 = vmatpush1.msra.mxu0 %v236
    %1092 = vmatprep.subr.mxu0 0.0
    %1093 = vmatpush1.msra.mxu0 %v237
    %1094 = vmatprep.subr.mxu0 0.0
    %1095 = vmatpush1.msra.mxu0 %v238
    %1096 = vmatprep.subr.mxu0 0.0
    %1097 = vmatpush1.msra.mxu0 %v239
    %1098 = vmatprep.mubr.f32.mxu0 %v961
    %1099 = vmatmul.mubr.f32.gmra.mrb[0].mxu0 %v1033
    %v1100 = vpop.f32.mrb[0].mxu0
    %v1101 = vadd.f32 %v317, %v1100
    %v1102 = vpop.f32.mrb[0].mxu0
    %1103 = vdwg.mxu0
    %v1104 = vtanh.pop %v1101
    %1105 = vmatprep.subr.mxu0 0.0
    %1106 = vmatpush1.msra.mxu0 %v192
    %1107 = vmatprep.subr.mxu0 0.0
    %1108 = vmatpush1.msra.mxu0 %v193
    %1109 = vmatprep.subr.mxu0 0.0
    %1110 = vmatpush1.msra.mxu0 %v194
    %1111 = vmatprep.subr.mxu0 0.0
    %1112 = vmatpush1.msra.mxu0 %v195
    %1113 = vmatprep.subr.mxu0 0.0
    %1114 = vmatpush1.msra.mxu0 %v196
    %1115 = vmatprep.subr.mxu0 0.0
    %1116 = vmatpush1.msra.mxu0 %v197
    %1117 = vmatprep.subr.mxu0 0.0
    %1118 = vmatpush1.msra.mxu0 %v198
    %1119 = vmatprep.subr.mxu0 0.0
    %1120 = vmatpush1.msra.mxu0 %v199
    %1121 = vmatprep.subr.mxu0 0.0
    %1122 = vmatpush1.msra.mxu0 %v200
    %1123 = vmatprep.subr.mxu0 0.0
    %1124 = vmatpush1.msra.mxu0 %v201
    %1125 = vmatprep.subr.mxu0 0.0
    %1126 = vmatpush1.msra.mxu0 %v202
    %1127 = vmatprep.subr.mxu0 0.0
    %1128 = vmatpush1.msra.mxu0 %v203
    %1129 = vmatprep.subr.mxu0 0.0
    %1130 = vmatpush1.msra.mxu0 %v204
    %1131 = vmatprep.subr.mxu0 0.0
    %1132 = vmatpush1.msra.mxu0 %v205
    %1133 = vmatprep.subr.mxu0 0.0
    %1134 = vmatpush1.msra.mxu0 %v206
    %1135 = vmatprep.subr.mxu0 0.0
    %1136 = vmatpush1.msra.mxu0 %v207
    %1137 = vmatprep.subr.mxu0 0.0
    %1138 = vmatpush1.msra.mxu0 0.0
    %1139 = vmatprep.subr.mxu0 0.0
    %1140 = vmatpush1.msra.mxu0 0.0
    %1141 = vmatprep.subr.mxu0 0.0
    %1142 = vmatpush1.msra.mxu0 0.0
    %1143 = vmatprep.subr.mxu0 0.0
    %1144 = vmatpush1.msra.mxu0 0.0
    %1145 = vmatprep.subr.mxu0 0.0
    %1146 = vmatpush1.msra.mxu0 0.0
    %1147 = vmatprep.subr.mxu0 0.0
    %1148 = vmatpush1.msra.mxu0 0.0
    %1149 = vmatprep.subr.mxu0 0.0
    %1150 = vmatpush1.msra.mxu0 0.0
    %1151 = vmatprep.subr.mxu0 0.0
    %1152 = vmatpush1.msra.mxu0 0.0
    %1153 = vmatprep.subr.mxu0 0.0
    %1154 = vmatpush1.msra.mxu0 0.0
    %1155 = vmatprep.subr.mxu0 0.0
    %1156 = vmatpush1.msra.mxu0 0.0
    %1157 = vmatprep.subr.mxu0 0.0
    %1158 = vmatpush1.msra.mxu0 0.0
    %1159 = vmatprep.subr.mxu0 0.0
    %1160 = vmatpush1.msra.mxu0 0.0
    %1161 = vmatprep.subr.mxu0 0.0
    %1162 = vmatpush1.msra.mxu0 0.0
    %1163 = vmatprep.subr.mxu0 0.0
    %1164 = vmatpush1.msra.mxu0 0.0
    %1165 = vmatprep.subr.mxu0 0.0
    %1166 = vmatpush1.msra.mxu0 0.0
    %1167 = vmatprep.subr.mxu0 0.0
    %1168 = vmatpush1.msra.mxu0 0.0
    %1169 = vmatprep.mubr.f32.mxu0 0.0
    %1170 = vmatmul.mubr.f32.gmra.mrb[0].mxu0 %v1033
    %v1171 = vpop.f32.mrb[0].mxu0
    %v1172 = vadd.f32 0.0, %v1171
    %v1173 = vpop.f32.mrb[0].mxu0
    %1174 = vdwg.mxu0
    %v1175 = vadd.f32 %v184, %v1172
    %v1176 = vtanh.pop %v1175
    %1177 = vmatprep.subr.mxu0 0.0
    %1178 = vmatpush1.msra.mxu0 %v208
    %1179 = vmatprep.subr.mxu0 0.0
    %1180 = vmatpush1.msra.mxu0 %v209
    %1181 = vmatprep.subr.mxu0 0.0
    %1182 = vmatpush1.msra.mxu0 %v210
    %1183 = vmatprep.subr.mxu0 0.0
    %1184 = vmatpush1.msra.mxu0 %v211
    %1185 = vmatprep.subr.mxu0 0.0
    %1186 = vmatpush1.msra.mxu0 %v212
    %1187 = vmatprep.subr.mxu0 0.0
    %1188 = vmatpush1.msra.mxu0 %v213
    %1189 = vmatprep.subr.mxu0 0.0
    %1190 = vmatpush1.msra.mxu0 %v214
    %1191 = vmatprep.subr.mxu0 0.0
    %1192 = vmatpush1.msra.mxu0 %v215
    %1193 = vmatprep.subr.mxu0 0.0
    %1194 = vmatpush1.msra.mxu0 %v216
    %1195 = vmatprep.subr.mxu0 0.0
    %1196 = vmatpush1.msra.mxu0 %v217
    %1197 = vmatprep.subr.mxu0 0.0
    %1198 = vmatpush1.msra.mxu0 %v218
    %1199 = vmatprep.subr.mxu0 0.0
    %1200 = vmatpush1.msra.mxu0 %v219
    %1201 = vmatprep.subr.mxu0 0.0
    %1202 = vmatpush1.msra.mxu0 %v220
    %1203 = vmatprep.subr.mxu0 0.0
    %1204 = vmatpush1.msra.mxu0 %v221
    %1205 = vmatprep.subr.mxu0 0.0
    %1206 = vmatpush1.msra.mxu0 %v222
    %1207 = vmatprep.subr.mxu0 0.0
    %1208 = vmatpush1.msra.mxu0 %v223
    %1209 = vmatprep.subr.mxu0 0.0
    %1210 = vmatpush1.msra.mxu0 %v224
    %1211 = vmatprep.subr.mxu0 0.0
    %1212 = vmatpush1.msra.mxu0 %v225
    %1213 = vmatprep.subr.mxu0 0.0
    %1214 = vmatpush1.msra.mxu0 %v226
    %1215 = vmatprep.subr.mxu0 0.0
    %1216 = vmatpush1.msra.mxu0 %v227
    %1217 = vmatprep.subr.mxu0 0.0
    %1218 = vmatpush1.msra.mxu0 %v228
    %1219 = vmatprep.subr.mxu0 0.0
    %1220 = vmatpush1.msra.mxu0 %v229
    %1221 = vmatprep.subr.mxu0 0.0
    %1222 = vmatpush1.msra.mxu0 %v230
    %1223 = vmatprep.subr.mxu0 0.0
    %1224 = vmatpush1.msra.mxu0 %v231
    %1225 = vmatprep.subr.mxu0 0.0
    %1226 = vmatpush1.msra.mxu0 %v232
    %1227 = vmatprep.subr.mxu0 0.0
    %1228 = vmatpush1.msra.mxu0 %v233
    %1229 = vmatprep.subr.mxu0 0.0
    %1230 = vmatpush1.msra.mxu0 %v234
    %1231 = vmatprep.subr.mxu0 0.0
    %1232 = vmatpush1.msra.mxu0 %v235
    %1233 = vmatprep.subr.mxu0 0.0
    %1234 = vmatpush1.msra.mxu0 %v236
    %1235 = vmatprep.subr.mxu0 0.0
    %1236 = vmatpush1.msra.mxu0 %v237
    %1237 = vmatprep.subr.mxu0 0.0
    %1238 = vmatpush1.msra.mxu0 %v238
    %1239 = vmatprep.subr.mxu0 0.0
    %1240 = vmatpush1.msra.mxu0 %v239
    %1241 = vmatprep.mubr.f32.mxu0 %v1104
    %1242 = vmatmul.mubr.f32.gmra.mrb[0].mxu0 %v1176
    %v1243 = vpop.f32.mrb[0].mxu0
    %v1244 = vadd.f32 %v317, %v1243
    %v1245 = vpop.f32.mrb[0].mxu0
    %1246 = vdwg.mxu0
    %v1247 = vtanh.pop %v1244
    %1248 = vmatprep.subr.mxu0 0.0
    %1249 = vmatpush1.msra.mxu0 %v192
    %1250 = vmatprep.subr.mxu0 0.0
    %1251 = vmatpush1.msra.mxu0 %v193
    %1252 = vmatprep.subr.mxu0 0.0
    %1253 = vmatpush1.msra.mxu0 %v194
    %1254 = vmatprep.subr.mxu0 0.0
    %1255 = vmatpush1.msra.mxu0 %v195
    %1256 = vmatprep.subr.mxu0 0.0
    %1257 = vmatpush1.msra.mxu0 %v196
    %1258 = vmatprep.subr.mxu0 0.0
    %1259 = vmatpush1.msra.mxu0 %v197
    %1260 = vmatprep.subr.mxu0 0.0
    %1261 = vmatpush1.msra.mxu0 %v198
    %1262 = vmatprep.subr.mxu0 0.0
    %1263 = vmatpush1.msra.mxu0 %v199
    %1264 = vmatprep.subr.mxu0 0.0
    %1265 = vmatpush1.msra.mxu0 %v200
    %1266 = vmatprep.subr.mxu0 0.0
    %1267 = vmatpush1.msra.mxu0 %v201
    %1268 = vmatprep.subr.mxu0 0.0
    %1269 = vmatpush1.msra.mxu0 %v202
    %1270 = vmatprep.subr.mxu0 0.0
    %1271 = vmatpush1.msra.mxu0 %v203
    %1272 = vmatprep.subr.mxu0 0.0
    %1273 = vmatpush1.msra.mxu0 %v204
    %1274 = vmatprep.subr.mxu0 0.0
    %1275 = vmatpush1.msra.mxu0 %v205
    %1276 = vmatprep.subr.mxu0 0.0
    %1277 = vmatpush1.msra.mxu0 %v206
    %1278 = vmatprep.subr.mxu0 0.0
    %1279 = vmatpush1.msra.mxu0 %v207
    %1280 = vmatprep.subr.mxu0 0.0
    %1281 = vmatpush1.msra.mxu0 0.0
    %1282 = vmatprep.subr.mxu0 0.0
    %1283 = vmatpush1.msra.mxu0 0.0
    %1284 = vmatprep.subr.mxu0 0.0
    %1285 = vmatpush1.msra.mxu0 0.0
    %1286 = vmatprep.subr.mxu0 0.0
    %1287 = vmatpush1.msra.mxu0 0.0
    %1288 = vmatprep.subr.mxu0 0.0
    %1289 = vmatpush1.msra.mxu0 0.0
    %1290 = vmatprep.subr.mxu0 0.0
    %1291 = vmatpush1.msra.mxu0 0.0
    %1292 = vmatprep.subr.mxu0 0.0
    %1293 = vmatpush1.msra.mxu0 0.0
    %1294 = vmatprep.subr.mxu0 0.0
    %1295 = vmatpush1.msra.mxu0 0.0
    %1296 = vmatprep.subr.mxu0 0.0
    %1297 = vmatpush1.msra.mxu0 0.0
    %1298 = vmatprep.subr.mxu0 0.0
    %1299 = vmatpush1.msra.mxu0 0.0
    %1300 = vmatprep.subr.mxu0 0.0
    %1301 = vmatpush1.msra.mxu0 0.0
    %1302 = vmatprep.subr.mxu0 0.0
    %1303 = vmatpush1.msra.mxu0 0.0
    %1304 = vmatprep.subr.mxu0 0.0
    %1305 = vmatpush1.msra.mxu0 0.0
    %1306 = vmatprep.subr.mxu0 0.0
    %1307 = vmatpush1.msra.mxu0 0.0
    %1308 = vmatprep.subr.mxu0 0.0
    %1309 = vmatpush1.msra.mxu0 0.0
    %1310 = vmatprep.subr.mxu0 0.0
    %1311 = vmatpush1.msra.mxu0 0.0
    %1312 = vmatprep.mubr.f32.mxu0 0.0
    %1313 = vmatmul.mubr.f32.gmra.mrb[0].mxu0 %v1176
    %v1314 = vpop.f32.mrb[0].mxu0
    %v1315 = vadd.f32 0.0, %v1314
    %v1316 = vpop.f32.mrb[0].mxu0
    %1317 = vdwg.mxu0
    %v1318 = vadd.f32 %v189, %v1315
    %v1319 = vtanh.pop %v1318
    %1320 = vmatprep.subr.mxu0 0.0
    %1321 = vmatpush1.msra.mxu0 %v208
    %1322 = vmatprep.subr.mxu0 0.0
    %1323 = vmatpush1.msra.mxu0 %v209
    %1324 = vmatprep.subr.mxu0 0.0
    %1325 = vmatpush1.msra.mxu0 %v210
    %1326 = vmatprep.subr.mxu0 0.0
    %1327 = vmatpush1.msra.mxu0 %v211
    %1328 = vmatprep.subr.mxu0 0.0
    %1329 = vmatpush1.msra.mxu0 %v212
    %1330 = vmatprep.subr.mxu0 0.0
    %1331 = vmatpush1.msra.mxu0 %v213
    %1332 = vmatprep.subr.mxu0 0.0
    %1333 = vmatpush1.msra.mxu0 %v214
    %1334 = vmatprep.subr.mxu0 0.0
    %1335 = vmatpush1.msra.mxu0 %v215
    %1336 = vmatprep.subr.mxu0 0.0
    %1337 = vmatpush1.msra.mxu0 %v216
    %1338 = vmatprep.subr.mxu0 0.0
    %1339 = vmatpush1.msra.mxu0 %v217
    %1340 = vmatprep.subr.mxu0 0.0
    %1341 = vmatpush1.msra.mxu0 %v218
    %1342 = vmatprep.subr.mxu0 0.0
    %1343 = vmatpush1.msra.mxu0 %v219
    %1344 = vmatprep.subr.mxu0 0.0
    %1345 = vmatpush1.msra.mxu0 %v220
    %1346 = vmatprep.subr.mxu0 0.0
    %1347 = vmatpush1.msra.mxu0 %v221
    %1348 = vmatprep.subr.mxu0 0.0
    %1349 = vmatpush1.msra.mxu0 %v222
    %1350 = vmatprep.subr.mxu0 0.0
    %1351 = vmatpush1.msra.mxu0 %v223
    %1352 = vmatprep.subr.mxu0 0.0
    %1353 = vmatpush1.msra.mxu0 %v224
    %1354 = vmatprep.subr.mxu0 0.0
    %1355 = vmatpush1.msra.mxu0 %v225
    %1356 = vmatprep.subr.mxu0 0.0
    %1357 = vmatpush1.msra.mxu0 %v226
    %1358 = vmatprep.subr.mxu0 0.0
    %1359 = vmatpush1.msra.mxu0 %v227
    %1360 = vmatprep.subr.mxu0 0.0
    %1361 = vmatpush1.msra.mxu0 %v228
    %1362 = vmatprep.subr.mxu0 0.0
    %1363 = vmatpush1.msra.mxu0 %v229
    %1364 = vmatprep.subr.mxu0 0.0
    %1365 = vmatpush1.msra.mxu0 %v230
    %1366 = vmatprep.subr.mxu0 0.0
    %1367 = vmatpush1.msra.mxu0 %v231
    %1368 = vmatprep.subr.mxu0 0.0
    %1369 = vmatpush1.msra.mxu0 %v232
    %1370 = vmatprep.subr.mxu0 0.0
    %1371 = vmatpush1.msra.mxu0 %v233
    %1372 = vmatprep.subr.mxu0 0.0
    %1373 = vmatpush1.msra.mxu0 %v234
    %1374 = vmatprep.subr.mxu0 0.0
    %1375 = vmatpush1.msra.mxu0 %v235
    %1376 = vmatprep.subr.mxu0 0.0
    %1377 = vmatpush1.msra.mxu0 %v236
    %1378 = vmatprep.subr.mxu0 0.0
    %1379 = vmatpush1.msra.mxu0 %v237
    %1380 = vmatprep.subr.mxu0 0.0
    %1381 = vmatpush1.msra.mxu0 %v238
    %1382 = vmatprep.subr.mxu0 0.0
    %1383 = vmatpush1.msra.mxu0 %v239
    %1384 = vmatprep.mubr.f32.mxu0 %v1247
    %1385 = vmatmul.mubr.f32.gmra.mrb[0].mxu0 %v1319
    %v1386 = vpop.f32.mrb[0].mxu0
    %v1387 = vadd.f32 %v317, %v1386
    %v1388 = vpop.f32.mrb[0].mxu0
    %1389 = vdwg.mxu0
    %v1390 = vtanh.pop %v1387
    %v1391 = vld [vmem:[%s6] sm:$0x1]
    %v1393 = vlaneseq
    %v1394 = vshrl.u32 %v1393, 7
    %v1395 = vsub.s32 0, %v1394
    %v1396 = vrot.slane %v1391, %v1395
    %v1398 = vmul.f32 %v1390, %v1396
    %1399 = vadd.xlane.f32.xlu0 %v1398
    %v1400 = vpop.xlane.xlu0 %1399
    %v1401 = vld [vmem:[#allocation2] sm:$0x1]
    %v1403 = vlaneseq
    %v1404 = vshrl.u32 %v1403, 7
    %v1405 = vsub.s32 0, %v1404
    %v1406 = vrot.slane %v1401, %v1405
    %v1408 = vadd.f32 %v1400, %v1406
    %v1409 = vxor.u32 %v1408, 2147483648
    %v1410 = vmul.f32 %v1409, 1.442695
    %v1411 = vpow.pop %v1410
    %v1412 = vadd.f32 %v1411, 1.0
    %v1413 = vrcp.pop %v1412
    %v1414 = vmul.f32 1.0, %v1413
    %vm1415 = vcmask 7168
    %1416 = vst.msk [vmem:[%s8] sm:$0xff] %vm1415, %v1414
    // Predicated region
    $region38: #{rnn_forward.1} parent=1 // pred_check
      _
    $region39: #{rnn_forward.1} parent=1 // pred_check_branch
      %1418 = sbr.rel (0) target = $region41
    $region40: #{rnn_forward.1} parent=1 // pred_region
      _
    $region41: #{rnn_forward.1} parent=1 // pred_fallthru
      _
    // Predicated region
    $region42: #{rnn_forward.1} parent=1 // pred_check
      _
    $region43: #{rnn_forward.1} parent=1 // pred_check_branch
      %1420 = sbr.rel (0) target = $region45
    $region44: #{rnn_forward.1} parent=1 // pred_region
      _
    $region45: #{rnn_forward.1} parent=1 // pred_fallthru
      _
    %1421 = vsyncpa [#allocation4], 1

</llo_original>
